<compile_context>
chip_gen: v6e
topology: v6e:2x2x1
jax: 0.10.0
libtpu: 0.0.40
codegen_flags: <defaults>
</compile_context>

<pallas_src>
import functools
import math

import jax
import jax.numpy as jnp
from jax.experimental import pallas as pl
from jax.experimental.pallas import tpu as pltpu


def _pma_kernel(q_ref, qs_ref, x_ref, wkv_ref, bkv_ref, wo_ref, bo_ref, o_ref,
                *, num_heads, num_seeds, tb, n, c):
    dh = c // num_heads

    # Fused K/V projection for the whole batch tile: (TB*N, C) @ (C, 2C).
    x2 = x_ref[...].reshape(tb * n, c)                 # leading-dim merge (free)
    kv = jnp.dot(x2, wkv_ref[...], preferred_element_type=jnp.float32)
    kv = kv + bkv_ref[...]                             # (TB*N, 2C)

    # Batch-invariant Q (projected in the wrapper); broadcast once, hoisted
    # out of the head loop.  qs is pre-scaled by 1/sqrt(dim_V).
    q_b = jnp.broadcast_to(q_ref[...], (tb, num_seeds, c))
    qs_b = jnp.broadcast_to(qs_ref[...], (tb, num_seeds, c))

    head_outs = []
    for h in range(num_heads):                         # static unroll (small H)
        lo = h * dh
        qh = qs_b[:, :, lo:lo + dh]                        # (TB, S, dh)
        kh = kv[:, lo:lo + dh].reshape(tb, n, dh)          # (TB, N, dh)
        vh = kv[:, c + lo:c + lo + dh].reshape(tb, n, dh)  # (TB, N, dh)

        # scores[t, s, n] = <Qs_h[s], K_h[t, n]>   (no explicit transpose)
        s = jnp.einsum('tsd,tnd->tsn', qh, kh,
                       preferred_element_type=jnp.float32)
        # PyTorch softmax(dim=1)  ==  softmax over the seed axis.
        m = jnp.max(s, axis=1, keepdims=True)
        e = jnp.exp(s - m)
        denom = jnp.sum(e, axis=1, keepdims=True)
        a = e * pl.reciprocal(denom, approx=False)         # (TB, S, N)

        av = jnp.einsum('tsn,tnd->tsd', a, vh,
                        preferred_element_type=jnp.float32)
        head_outs.append(q_b[:, :, lo:lo + dh] + av)       # residual, unscaled Q

    att = jnp.concatenate(head_outs, axis=-1)              # (TB, S, C)
    att2 = att.reshape(tb * num_seeds, c)                  # batch-major, seed-minor

    # out + relu(fc_o(out)) on one 2-D slab (single MXU matmul per step).
    ff = jnp.dot(att2, wo_ref[...], preferred_element_type=jnp.float32)
    ff = ff + bo_ref[...]
    res = att2 + jnp.maximum(ff, 0.0)

    o_ref[...] = res.astype(o_ref.dtype)


def _pick_batch_tile(batch, n, c, num_seeds, itemsize=4,
                     target_rows=256, vmem_budget=8 * 1024 * 1024):
    """Largest divisor of `batch` whose (double-buffered) x/out blocks stay
    within a conservative VMEM budget while giving MXU-friendly row counts."""
    best = 1
    for tb in range(1, batch + 1):
        if batch % tb:
            continue
        rows_ok = tb * n <= max(n, target_rows)
        vmem = 2 * tb * (n + num_seeds) * c * itemsize   # x block + out block, x2 buffers
        if rows_ok and vmem <= vmem_budget:
            best = tb
    return best


def pma_forward(x, seeds, Wq, bq, Wk, bk, Wv, bv, Wo, bo, *, num_heads,
                batch_tile=None):
    """x: (B, N, C); seeds: (num_seeds, C); W*: (C_in, C_out); b*: (C,)."""
    B, N, C = x.shape
    num_seeds = seeds.shape[0]
    assert C % num_heads == 0

    tb = batch_tile if batch_tile is not None else _pick_batch_tile(B, N, C, num_seeds)
    assert B % tb == 0, f"batch {B} must be divisible by batch_tile {tb}"
    grid_b = B // tb

    f32 = jnp.float32
    # Batch-invariant Q projection hoisted out of the kernel; pre-scaled copy
    # folds the 1/sqrt(dim_V) score scale.
    Q = seeds.astype(f32) @ Wq.astype(f32) + bq.astype(f32)        # (S, C)
    Qs = Q * (1.0 / math.sqrt(C))
    # Fused K/V projection weight -> one MXU matmul inside the kernel.
    Wkv = jnp.concatenate([Wk, Wv], axis=1).astype(f32)            # (C, 2C)
    bkv = jnp.concatenate([bk, bv]).reshape(1, 2 * C).astype(f32)  # (1, 2C)
    bo2 = bo.reshape(1, C).astype(f32)

    kernel = functools.partial(_pma_kernel, num_heads=num_heads,
                               num_seeds=num_seeds, tb=tb, n=N, c=C)

    def full(shape):
        return pl.BlockSpec(shape, lambda b: (0,) * len(shape))

    out2d = pl.pallas_call(
        kernel,
        out_shape=jax.ShapeDtypeStruct((B * num_seeds, C), f32),
        grid_spec=pltpu.PrefetchScalarGridSpec(
            num_scalar_prefetch=0,
            grid=(grid_b,),
            in_specs=[
                full((num_seeds, C)),                           # Q (residual)
                full((num_seeds, C)),                           # Q * 1/sqrt(C)
                pl.BlockSpec((tb, N, C), lambda b: (b, 0, 0)),  # x batch tile
                full((C, 2 * C)), full((1, 2 * C)),             # Wkv, bkv
                full((C, C)), full((1, C)),                     # Wo, bo
            ],
            out_specs=pl.BlockSpec((tb * num_seeds, C), lambda b: (b, 0)),
        ),
        compiler_params=pltpu.CompilerParams(
            dimension_semantics=("parallel",),          # batch tiles independent
            vmem_limit_bytes=32 * 1024 * 1024),         # explicit budget (v7x-safe)
    )(Q, Qs, x.astype(f32), Wkv, bkv, Wo.astype(f32), bo2)

    return out2d.reshape(B, num_seeds, C)


def pma_reference(x, seeds, Wq, bq, Wk, bk, Wv, bv, Wo, bo, *, num_heads):
    """Plain-JAX replica of the PyTorch PMA/MAB forward (Conv=None, no LN/mask)."""
    B, N, C = x.shape
    nS = seeds.shape[0]
    dh = C // num_heads
    Q = seeds @ Wq + bq                          # (nS, C), same for each batch
    Qb = jnp.tile(Q[None], (B, 1, 1))            # (B, nS, C)
    K = jnp.einsum('bnc,cd->bnd', x, Wk) + bk
    V = jnp.einsum('bnc,cd->bnd', x, Wv) + bv
    outs = []
    for h in range(num_heads):
        Qh = Qb[:, :, h * dh:(h + 1) * dh]
        Kh = K[:, :, h * dh:(h + 1) * dh]
        Vh = V[:, :, h * dh:(h + 1) * dh]
        sc = jnp.einsum('bsd,bnd->bsn', Qh, Kh) / math.sqrt(C)
        A = jax.nn.softmax(sc, axis=1)           # softmax over the seed axis
        outs.append(Qh + jnp.einsum('bsn,bnd->bsd', A, Vh))
    out = jnp.concatenate(outs, axis=-1)
    ff = jnp.einsum('bsc,cd->bsd', out, Wo) + bo
    return out + jax.nn.relu(ff)


if __name__ == "__main__":
    B, N, C = 8, 16, 32
    num_heads, num_seeds = 4, 8

    key = jax.random.PRNGKey(0)
    ks = jax.random.split(key, 10)

    x = jax.random.normal(ks[0], (B, N, C), dtype=jnp.float32)

    # Deterministic parameter init (xavier-ish scaling); shapes match the module.
    xavier = math.sqrt(6.0 / (C + C))
    seeds = jax.random.uniform(ks[1], (num_seeds, C), minval=-xavier, maxval=xavier)
    Wq = jax.random.uniform(ks[2], (C, C), minval=-xavier, maxval=xavier)
    Wk = jax.random.uniform(ks[3], (C, C), minval=-xavier, maxval=xavier)
    Wv = jax.random.uniform(ks[4], (C, C), minval=-xavier, maxval=xavier)
    Wo = jax.random.uniform(ks[5], (C, C), minval=-xavier, maxval=xavier)
    bq = jax.random.uniform(ks[6], (C,), minval=-0.1, maxval=0.1)
    bk = jax.random.uniform(ks[7], (C,), minval=-0.1, maxval=0.1)
    bv = jax.random.uniform(ks[8], (C,), minval=-0.1, maxval=0.1)
    bo = jax.random.uniform(ks[9], (C,), minval=-0.1, maxval=0.1)

    # batch_tile=2 -> 4 grid steps of 2 batch elements each (exercises both the
    # batch-tiling and the multi-step pipeline / index maps).
    out = pma_forward(x, seeds, Wq, bq, Wk, bk, Wv, bv, Wo, bo,
                      num_heads=num_heads, batch_tile=2)
    out = jax.block_until_ready(out)

    ref = pma_reference(x, seeds, Wq, bq, Wk, bk, Wv, bv, Wo, bo,
                        num_heads=num_heads)
    assert out.shape == (B, num_seeds, C)
    assert jnp.allclose(out, ref, rtol=1e-4, atol=1e-5), "mismatch vs reference"

    print("KERNEL_OK")
</pallas_src>

<mosaic_0001>
module attributes {stable_mosaic.version = 11 : i64} {
  func.func @_pma_kernel(%arg0: i32, %arg1: memref<8x32xf32, #tpu.memory_space<vmem>>, %arg2: memref<8x32xf32, #tpu.memory_space<vmem>>, %arg3: memref<2x16x32xf32, #tpu.memory_space<vmem>>, %arg4: memref<32x64xf32, #tpu.memory_space<vmem>>, %arg5: memref<1x64xf32, #tpu.memory_space<vmem>>, %arg6: memref<32x32xf32, #tpu.memory_space<vmem>>, %arg7: memref<1x32xf32, #tpu.memory_space<vmem>>, %arg8: memref<16x32xf32, #tpu.memory_space<vmem>>) attributes {dimension_semantics = [#tpu.dimension_semantics<parallel>], iteration_bounds = array<i64: 4>, scalar_prefetch = 0 : i64, scratch_operands = 0 : i64, tpu.core_type = #tpu.core_type<tc>, window_params = [{pipeline_mode = #tpu.pipeline_mode<synchronous>, transform_indices = @transform_0, window_bounds = array<i64: 8, 32>}, {pipeline_mode = #tpu.pipeline_mode<synchronous>, transform_indices = @transform_1, window_bounds = array<i64: 8, 32>}, {transform_indices = @transform_2, window_bounds = array<i64: 2, 16, 32>}, {pipeline_mode = #tpu.pipeline_mode<synchronous>, transform_indices = @transform_3, window_bounds = array<i64: 32, 64>}, {pipeline_mode = #tpu.pipeline_mode<synchronous>, transform_indices = @transform_4, window_bounds = array<i64: 1, 64>}, {pipeline_mode = #tpu.pipeline_mode<synchronous>, transform_indices = @transform_5, window_bounds = array<i64: 32, 32>}, {pipeline_mode = #tpu.pipeline_mode<synchronous>, transform_indices = @transform_6, window_bounds = array<i64: 1, 32>}, {transform_indices = @transform_7, window_bounds = array<i64: 16, 32>}]} {
    %c0 = arith.constant 0 : index
    %c0_0 = arith.constant 0 : index
    %c0_1 = arith.constant 0 : index
    %0 = vector.load %arg3[%c0, %c0_0, %c0_1] : memref<2x16x32xf32, #tpu.memory_space<vmem>>, vector<2x16x32xf32>
    %1 = vector.shape_cast %0 : vector<2x16x32xf32> to vector<32x32xf32>
    %c0_2 = arith.constant 0 : index
    %c0_3 = arith.constant 0 : index
    %2 = vector.load %arg4[%c0_2, %c0_3] : memref<32x64xf32, #tpu.memory_space<vmem>>, vector<32x64xf32>
    %cst = arith.constant dense<0.000000e+00> : vector<32x64xf32>
    %3 = tpu.matmul %1, %2, %cst {dimension_numbers = #tpu.dot_dimension_numbers<[1], [0], [0], [1], [0, 0, 1, 1], [], []>} : vector<32x32xf32>, vector<32x64xf32>, vector<32x64xf32> -> vector<32x64xf32>
    %c0_4 = arith.constant 0 : index
    %c0_5 = arith.constant 0 : index
    %4 = vector.load %arg5[%c0_4, %c0_5] : memref<1x64xf32, #tpu.memory_space<vmem>>, vector<1x64xf32>
    %5 = vector.broadcast %4 : vector<1x64xf32> to vector<32x64xf32>
    %6 = arith.addf %3, %5 : vector<32x64xf32>
    %c0_6 = arith.constant 0 : index
    %c0_7 = arith.constant 0 : index
    %7 = vector.load %arg1[%c0_6, %c0_7] : memref<8x32xf32, #tpu.memory_space<vmem>>, vector<8x32xf32>
    %8 = vector.shape_cast %7 : vector<8x32xf32> to vector<1x8x32xf32>
    %9 = vector.broadcast %8 : vector<1x8x32xf32> to vector<2x8x32xf32>
    %c0_8 = arith.constant 0 : index
    %c0_9 = arith.constant 0 : index
    %10 = vector.load %arg2[%c0_8, %c0_9] : memref<8x32xf32, #tpu.memory_space<vmem>>, vector<8x32xf32>
    %11 = vector.shape_cast %10 : vector<8x32xf32> to vector<1x8x32xf32>
    %12 = vector.broadcast %11 : vector<1x8x32xf32> to vector<2x8x32xf32>
    %13 = vector.extract_strided_slice %12 {offsets = [0, 0, 0], sizes = [2, 8, 8], strides = [1, 1, 1]} : vector<2x8x32xf32> to vector<2x8x8xf32>
    %14 = vector.extract_strided_slice %6 {offsets = [0, 0], sizes = [32, 8], strides = [1, 1]} : vector<32x64xf32> to vector<32x8xf32>
    %15 = vector.shape_cast %14 : vector<32x8xf32> to vector<2x16x8xf32>
    %16 = vector.extract_strided_slice %6 {offsets = [0, 32], sizes = [32, 8], strides = [1, 1]} : vector<32x64xf32> to vector<32x8xf32>
    %17 = vector.shape_cast %16 : vector<32x8xf32> to vector<2x16x8xf32>
    "tpu.trace_start"() <{level = 10 : i32, message = "tsd,tnd->tsn"}> : () -> ()
    %cst_10 = arith.constant dense<0.000000e+00> : vector<2x8x16xf32>
    %18 = tpu.matmul %13, %15, %cst_10 {dimension_numbers = #tpu.dot_dimension_numbers<[2], [2], [1], [1], [0, 0, 0, 1, 1, 1], [0], [0]>} : vector<2x8x8xf32>, vector<2x16x8xf32>, vector<2x8x16xf32> -> vector<2x8x16xf32>
    "tpu.trace_stop"() : () -> ()
    %cst_11 = arith.constant dense<0xFF800000> : vector<2x16xf32>
    %19 = vector.multi_reduction <maximumf>, %18, %cst_11 [1] : vector<2x8x16xf32> to vector<2x16xf32>
    %20 = vector.shape_cast %19 : vector<2x16xf32> to vector<2x1x16xf32>
    %21 = vector.broadcast %20 : vector<2x1x16xf32> to vector<2x8x16xf32>
    %22 = arith.subf %18, %21 : vector<2x8x16xf32>
    %23 = math.exp %22 : vector<2x8x16xf32>
    %cst_12 = arith.constant dense<0.000000e+00> : vector<2x16xf32>
    %24 = vector.multi_reduction <add>, %23, %cst_12 [1] : vector<2x8x16xf32> to vector<2x16xf32>
    %25 = vector.shape_cast %24 : vector<2x16xf32> to vector<2x1x16xf32>
    %26 = tpu.reciprocal %25 : vector<2x1x16xf32> -> vector<2x1x16xf32>
    %27 = vector.broadcast %26 : vector<2x1x16xf32> to vector<2x8x16xf32>
    %28 = arith.mulf %23, %27 : vector<2x8x16xf32>
    "tpu.trace_start"() <{level = 10 : i32, message = "tsn,tnd->tsd"}> : () -> ()
    %cst_13 = arith.constant dense<0.000000e+00> : vector<2x8x8xf32>
    %29 = tpu.matmul %28, %17, %cst_13 {dimension_numbers = #tpu.dot_dimension_numbers<[2], [1], [1], [2], [0, 0, 0, 1, 1, 2], [0], [0]>} : vector<2x8x16xf32>, vector<2x16x8xf32>, vector<2x8x8xf32> -> vector<2x8x8xf32>
    "tpu.trace_stop"() : () -> ()
    %30 = vector.extract_strided_slice %9 {offsets = [0, 0, 0], sizes = [2, 8, 8], strides = [1, 1, 1]} : vector<2x8x32xf32> to vector<2x8x8xf32>
    %31 = arith.addf %30, %29 : vector<2x8x8xf32>
    %32 = vector.extract_strided_slice %12 {offsets = [0, 0, 8], sizes = [2, 8, 8], strides = [1, 1, 1]} : vector<2x8x32xf32> to vector<2x8x8xf32>
    %33 = vector.extract_strided_slice %6 {offsets = [0, 8], sizes = [32, 8], strides = [1, 1]} : vector<32x64xf32> to vector<32x8xf32>
    %34 = vector.shape_cast %33 : vector<32x8xf32> to vector<2x16x8xf32>
    %35 = vector.extract_strided_slice %6 {offsets = [0, 40], sizes = [32, 8], strides = [1, 1]} : vector<32x64xf32> to vector<32x8xf32>
    %36 = vector.shape_cast %35 : vector<32x8xf32> to vector<2x16x8xf32>
    "tpu.trace_start"() <{level = 10 : i32, message = "tsd,tnd->tsn"}> : () -> ()
    %cst_14 = arith.constant dense<0.000000e+00> : vector<2x8x16xf32>
    %37 = tpu.matmul %32, %34, %cst_14 {dimension_numbers = #tpu.dot_dimension_numbers<[2], [2], [1], [1], [0, 0, 0, 1, 1, 1], [0], [0]>} : vector<2x8x8xf32>, vector<2x16x8xf32>, vector<2x8x16xf32> -> vector<2x8x16xf32>
    "tpu.trace_stop"() : () -> ()
    %cst_15 = arith.constant dense<0xFF800000> : vector<2x16xf32>
    %38 = vector.multi_reduction <maximumf>, %37, %cst_15 [1] : vector<2x8x16xf32> to vector<2x16xf32>
    %39 = vector.shape_cast %38 : vector<2x16xf32> to vector<2x1x16xf32>
    %40 = vector.broadcast %39 : vector<2x1x16xf32> to vector<2x8x16xf32>
    %41 = arith.subf %37, %40 : vector<2x8x16xf32>
    %42 = math.exp %41 : vector<2x8x16xf32>
    %cst_16 = arith.constant dense<0.000000e+00> : vector<2x16xf32>
    %43 = vector.multi_reduction <add>, %42, %cst_16 [1] : vector<2x8x16xf32> to vector<2x16xf32>
    %44 = vector.shape_cast %43 : vector<2x16xf32> to vector<2x1x16xf32>
    %45 = tpu.reciprocal %44 : vector<2x1x16xf32> -> vector<2x1x16xf32>
    %46 = vector.broadcast %45 : vector<2x1x16xf32> to vector<2x8x16xf32>
    %47 = arith.mulf %42, %46 : vector<2x8x16xf32>
    "tpu.trace_start"() <{level = 10 : i32, message = "tsn,tnd->tsd"}> : () -> ()
    %cst_17 = arith.constant dense<0.000000e+00> : vector<2x8x8xf32>
    %48 = tpu.matmul %47, %36, %cst_17 {dimension_numbers = #tpu.dot_dimension_numbers<[2], [1], [1], [2], [0, 0, 0, 1, 1, 2], [0], [0]>} : vector<2x8x16xf32>, vector<2x16x8xf32>, vector<2x8x8xf32> -> vector<2x8x8xf32>
    "tpu.trace_stop"() : () -> ()
    %49 = vector.extract_strided_slice %9 {offsets = [0, 0, 8], sizes = [2, 8, 8], strides = [1, 1, 1]} : vector<2x8x32xf32> to vector<2x8x8xf32>
    %50 = arith.addf %49, %48 : vector<2x8x8xf32>
    %51 = vector.extract_strided_slice %12 {offsets = [0, 0, 16], sizes = [2, 8, 8], strides = [1, 1, 1]} : vector<2x8x32xf32> to vector<2x8x8xf32>
    %52 = vector.extract_strided_slice %6 {offsets = [0, 16], sizes = [32, 8], strides = [1, 1]} : vector<32x64xf32> to vector<32x8xf32>
    %53 = vector.shape_cast %52 : vector<32x8xf32> to vector<2x16x8xf32>
    %54 = vector.extract_strided_slice %6 {offsets = [0, 48], sizes = [32, 8], strides = [1, 1]} : vector<32x64xf32> to vector<32x8xf32>
    %55 = vector.shape_cast %54 : vector<32x8xf32> to vector<2x16x8xf32>
    "tpu.trace_start"() <{level = 10 : i32, message = "tsd,tnd->tsn"}> : () -> ()
    %cst_18 = arith.constant dense<0.000000e+00> : vector<2x8x16xf32>
    %56 = tpu.matmul %51, %53, %cst_18 {dimension_numbers = #tpu.dot_dimension_numbers<[2], [2], [1], [1], [0, 0, 0, 1, 1, 1], [0], [0]>} : vector<2x8x8xf32>, vector<2x16x8xf32>, vector<2x8x16xf32> -> vector<2x8x16xf32>
    "tpu.trace_stop"() : () -> ()
    %cst_19 = arith.constant dense<0xFF800000> : vector<2x16xf32>
    %57 = vector.multi_reduction <maximumf>, %56, %cst_19 [1] : vector<2x8x16xf32> to vector<2x16xf32>
    %58 = vector.shape_cast %57 : vector<2x16xf32> to vector<2x1x16xf32>
    %59 = vector.broadcast %58 : vector<2x1x16xf32> to vector<2x8x16xf32>
    %60 = arith.subf %56, %59 : vector<2x8x16xf32>
    %61 = math.exp %60 : vector<2x8x16xf32>
    %cst_20 = arith.constant dense<0.000000e+00> : vector<2x16xf32>
    %62 = vector.multi_reduction <add>, %61, %cst_20 [1] : vector<2x8x16xf32> to vector<2x16xf32>
    %63 = vector.shape_cast %62 : vector<2x16xf32> to vector<2x1x16xf32>
    %64 = tpu.reciprocal %63 : vector<2x1x16xf32> -> vector<2x1x16xf32>
    %65 = vector.broadcast %64 : vector<2x1x16xf32> to vector<2x8x16xf32>
    %66 = arith.mulf %61, %65 : vector<2x8x16xf32>
    "tpu.trace_start"() <{level = 10 : i32, message = "tsn,tnd->tsd"}> : () -> ()
    %cst_21 = arith.constant dense<0.000000e+00> : vector<2x8x8xf32>
    %67 = tpu.matmul %66, %55, %cst_21 {dimension_numbers = #tpu.dot_dimension_numbers<[2], [1], [1], [2], [0, 0, 0, 1, 1, 2], [0], [0]>} : vector<2x8x16xf32>, vector<2x16x8xf32>, vector<2x8x8xf32> -> vector<2x8x8xf32>
    "tpu.trace_stop"() : () -> ()
    %68 = vector.extract_strided_slice %9 {offsets = [0, 0, 16], sizes = [2, 8, 8], strides = [1, 1, 1]} : vector<2x8x32xf32> to vector<2x8x8xf32>
    %69 = arith.addf %68, %67 : vector<2x8x8xf32>
    %70 = vector.extract_strided_slice %12 {offsets = [0, 0, 24], sizes = [2, 8, 8], strides = [1, 1, 1]} : vector<2x8x32xf32> to vector<2x8x8xf32>
    %71 = vector.extract_strided_slice %6 {offsets = [0, 24], sizes = [32, 8], strides = [1, 1]} : vector<32x64xf32> to vector<32x8xf32>
    %72 = vector.shape_cast %71 : vector<32x8xf32> to vector<2x16x8xf32>
    %73 = vector.extract_strided_slice %6 {offsets = [0, 56], sizes = [32, 8], strides = [1, 1]} : vector<32x64xf32> to vector<32x8xf32>
    %74 = vector.shape_cast %73 : vector<32x8xf32> to vector<2x16x8xf32>
    "tpu.trace_start"() <{level = 10 : i32, message = "tsd,tnd->tsn"}> : () -> ()
    %cst_22 = arith.constant dense<0.000000e+00> : vector<2x8x16xf32>
    %75 = tpu.matmul %70, %72, %cst_22 {dimension_numbers = #tpu.dot_dimension_numbers<[2], [2], [1], [1], [0, 0, 0, 1, 1, 1], [0], [0]>} : vector<2x8x8xf32>, vector<2x16x8xf32>, vector<2x8x16xf32> -> vector<2x8x16xf32>
    "tpu.trace_stop"() : () -> ()
    %cst_23 = arith.constant dense<0xFF800000> : vector<2x16xf32>
    %76 = vector.multi_reduction <maximumf>, %75, %cst_23 [1] : vector<2x8x16xf32> to vector<2x16xf32>
    %77 = vector.shape_cast %76 : vector<2x16xf32> to vector<2x1x16xf32>
    %78 = vector.broadcast %77 : vector<2x1x16xf32> to vector<2x8x16xf32>
    %79 = arith.subf %75, %78 : vector<2x8x16xf32>
    %80 = math.exp %79 : vector<2x8x16xf32>
    %cst_24 = arith.constant dense<0.000000e+00> : vector<2x16xf32>
    %81 = vector.multi_reduction <add>, %80, %cst_24 [1] : vector<2x8x16xf32> to vector<2x16xf32>
    %82 = vector.shape_cast %81 : vector<2x16xf32> to vector<2x1x16xf32>
    %83 = tpu.reciprocal %82 : vector<2x1x16xf32> -> vector<2x1x16xf32>
    %84 = vector.broadcast %83 : vector<2x1x16xf32> to vector<2x8x16xf32>
    %85 = arith.mulf %80, %84 : vector<2x8x16xf32>
    "tpu.trace_start"() <{level = 10 : i32, message = "tsn,tnd->tsd"}> : () -> ()
    %cst_25 = arith.constant dense<0.000000e+00> : vector<2x8x8xf32>
    %86 = tpu.matmul %85, %74, %cst_25 {dimension_numbers = #tpu.dot_dimension_numbers<[2], [1], [1], [2], [0, 0, 0, 1, 1, 2], [0], [0]>} : vector<2x8x16xf32>, vector<2x16x8xf32>, vector<2x8x8xf32> -> vector<2x8x8xf32>
    "tpu.trace_stop"() : () -> ()
    %87 = vector.extract_strided_slice %9 {offsets = [0, 0, 24], sizes = [2, 8, 8], strides = [1, 1, 1]} : vector<2x8x32xf32> to vector<2x8x8xf32>
    %88 = arith.addf %87, %86 : vector<2x8x8xf32>
    %89 = tpu.concatenate %31, %50, %69, %88 in 2 : vector<2x8x8xf32>, vector<2x8x8xf32>, vector<2x8x8xf32>, vector<2x8x8xf32> -> vector<2x8x32xf32>
    %90 = vector.shape_cast %89 : vector<2x8x32xf32> to vector<16x32xf32>
    %c0_26 = arith.constant 0 : index
    %c0_27 = arith.constant 0 : index
    %91 = vector.load %arg6[%c0_26, %c0_27] : memref<32x32xf32, #tpu.memory_space<vmem>>, vector<32x32xf32>
    %cst_28 = arith.constant dense<0.000000e+00> : vector<16x32xf32>
    %92 = tpu.matmul %90, %91, %cst_28 {dimension_numbers = #tpu.dot_dimension_numbers<[1], [0], [0], [1], [0, 0, 1, 1], [], []>} : vector<16x32xf32>, vector<32x32xf32>, vector<16x32xf32> -> vector<16x32xf32>
    %c0_29 = arith.constant 0 : index
    %c0_30 = arith.constant 0 : index
    %93 = vector.load %arg7[%c0_29, %c0_30] : memref<1x32xf32, #tpu.memory_space<vmem>>, vector<1x32xf32>
    %94 = vector.broadcast %93 : vector<1x32xf32> to vector<16x32xf32>
    %95 = arith.addf %92, %94 : vector<16x32xf32>
    %cst_31 = arith.constant 0.000000e+00 : f32
    %96 = vector.broadcast %cst_31 : f32 to vector<16x32xf32>
    %97 = arith.maximumf %95, %96 : vector<16x32xf32>
    %98 = arith.addf %90, %97 : vector<16x32xf32>
    %c0_32 = arith.constant 0 : index
    %c0_33 = arith.constant 0 : index
    %99 = vector.load %arg8[%c0_32, %c0_33] : memref<16x32xf32, #tpu.memory_space<vmem>>, vector<16x32xf32>
    tpu.vector_store %arg8[%c0_32, %c0_33], %98 {strides = array<i32>} : memref<16x32xf32, #tpu.memory_space<vmem>>, vector<16x32xf32>,
    return
  }
  func.func @transform_0(%arg0: i32) -> (i32, i32) {
    %c0_i32 = arith.constant 0 : i32
    %c0_i32_0 = arith.constant 0 : i32
    %c0_i32_1 = arith.constant 0 : i32
    return %c0_i32, %c0_i32_0 : i32, i32
  }
  func.func @transform_1(%arg0: i32) -> (i32, i32) {
    %c0_i32 = arith.constant 0 : i32
    %c0_i32_0 = arith.constant 0 : i32
    %c0_i32_1 = arith.constant 0 : i32
    return %c0_i32, %c0_i32_0 : i32, i32
  }
  func.func @transform_2(%arg0: i32) -> (i32, i32, i32) {
    %c0_i32 = arith.constant 0 : i32
    %c0_i32_0 = arith.constant 0 : i32
    %c0_i32_1 = arith.constant 0 : i32
    return %arg0, %c0_i32, %c0_i32_0 : i32, i32, i32
  }
  func.func @transform_3(%arg0: i32) -> (i32, i32) {
    %c0_i32 = arith.constant 0 : i32
    %c0_i32_0 = arith.constant 0 : i32
    %c0_i32_1 = arith.constant 0 : i32
    return %c0_i32, %c0_i32_0 : i32, i32
  }
  func.func @transform_4(%arg0: i32) -> (i32, i32) {
    %c0_i32 = arith.constant 0 : i32
    %c0_i32_0 = arith.constant 0 : i32
    %c0_i32_1 = arith.constant 0 : i32
    return %c0_i32, %c0_i32_0 : i32, i32
  }
  func.func @transform_5(%arg0: i32) -> (i32, i32) {
    %c0_i32 = arith.constant 0 : i32
    %c0_i32_0 = arith.constant 0 : i32
    %c0_i32_1 = arith.constant 0 : i32
    return %c0_i32, %c0_i32_0 : i32, i32
  }
  func.func @transform_6(%arg0: i32) -> (i32, i32) {
    %c0_i32 = arith.constant 0 : i32
    %c0_i32_0 = arith.constant 0 : i32
    %c0_i32_1 = arith.constant 0 : i32
    return %c0_i32, %c0_i32_0 : i32, i32
  }
  func.func @transform_7(%arg0: i32) -> (i32, i32) {
    %c0_i32 = arith.constant 0 : i32
    %c0_i32_0 = arith.constant 0 : i32
    return %arg0, %c0_i32 : i32, i32
  }
}

</mosaic_0001>

<llo_original>
// kernel: tpu_custom_call.1
$region0: #{tpu_custom_call.1}
  #allocation0 [shape = 'u32[]', space=smem, size = 0x4, offset = 0x4, fixed_abs, tag = 'smem constant byte address 0x4 - core index']
  #allocation1 [shape = 'u32[144,128]{1,0:T(1,128)}', space=vmem, size = 0x12000, scoped, tag = 'internal scratch']
  %s0 = inlined_call_operand.hbm [shape: f32[8,32], index: 0, kind: input, shape index: {}]
  %s1 = inlined_call_operand.hbm [shape: f32[8,32], index: 1, kind: input, shape index: {}]
  %s2 = inlined_call_operand.hbm [shape: f32[8,16,32], index: 2, kind: input, shape index: {}]
  %s3 = inlined_call_operand.hbm [shape: f32[32,64], index: 3, kind: input, shape index: {}]
  %s4 = inlined_call_operand.vmem [shape: f32[1,64], index: 4, kind: input, shape index: {}]
  %s5 = inlined_call_operand.hbm [shape: f32[32,32], index: 5, kind: input, shape index: {}]
  %s6 = inlined_call_operand.vmem [shape: f32[1,32], index: 6, kind: input, shape index: {}]
  %s7 = inlined_call_operand.vmem [shape: f32[64,32], index: 7, kind: output, shape index: {}]
  %s8 = sld [smem:[#allocation0]]
  $region81: #{tpu_custom_call.1} parent=0
    _
  %s10 = ssub.s32 1, %s8
  %s11 = scalar_select 0, %s10, %s8
  $region1: #{tpu_custom_call.1} parent=0
    #allocation2 [shape = 'u8[4096]{0}', space=vmem, size = 0x1000, scoped, tag = 'input window, operand 0, single buffered']
    #allocation3 [shape = 's32[2]{0}', space=sflag, size = 0x8, scoped, tag = 'scoped memory for tpu_custom_call.1']
    #allocation4 [shape = 'u8[4096]{0}', space=vmem, size = 0x1000, scoped, tag = 'input window, operand 1, single buffered']
    #allocation5 [shape = 's32[1]{0}', space=sflag, size = 0x4, scoped, tag = 'scoped memory for tpu_custom_call.1']
    #allocation6 [shape = 'u8[32768]{0}', space=vmem, size = 0x8000, scoped, tag = 'input window, operand 2']
    #allocation7 [shape = 'u8[16384]{0}', space=vmem, size = 0x4000, scoped, tag = 'input window, operand 3, single buffered']
    #allocation8 [shape = 'u8[16384]{0}', space=vmem, size = 0x4000, scoped, tag = 'input window, operand 5, single buffered']
    #allocation9 [shape = 's32[1]{0}', space=sflag, size = 0x4, scoped, tag = 'scoped memory for tpu_custom_call.1']
    %12 = vsyncpa [#allocation3], 0
    %13 = vsyncpa [#allocation5], 0
    %14 = vsyncpa [#allocation9], 0
    loop: start=0, step=1, limit=6
    $region2: #{tpu_custom_call.1} parent=1 // loop_pre_header
      _
    $region3: #{tpu_custom_call.1} parent=1 // loop_header
      %s16 = sphi 0, %s20
      %p17 = scmp.ge.s32.totalorder %s16, 6
      %s24 = sphi 0, %s24
      %s26 = sphi 0, %s24
      %s27 = sphi 0, %s26
      %s41 = sphi 0, %s27
      %s45 = sphi 0, %s45
      %s47 = sphi 0, %s45
      %s48 = sphi 0, %s47
      %s62 = sphi 0, %s48
      %s68 = sphi 0, %s70
      %s71 = sphi 0, %s68
      %s72 = sphi 0, %s71
      %s88 = sphi 0, %s72
      %s92 = sphi 0, %s92
      %s94 = sphi 0, %s92
      %s95 = sphi 0, %s94
      %s109 = sphi 0, %s95
      %s113 = sphi 0, %s113
      %s115 = sphi 0, %s113
      %s116 = sphi 0, %s115
      %s130 = sphi 0, %s116
      %s134 = sphi 0, %s134
      %s136 = sphi 0, %s134
      %s137 = sphi 0, %s136
      %s151 = sphi 0, %s137
      %s155 = sphi 0, %s155
      %s157 = sphi 0, %s155
      %s158 = sphi 0, %s157
      %s172 = sphi 0, %s158
      %s178 = sphi 0, %s180
      %s181 = sphi 0, %s178
      %s182 = sphi 0, %s181
      %s198 = sphi 0, %s182
    $region4: #{tpu_custom_call.1} parent=1 // loop_header_branch
      %19 = sbr.rel (%p17) target = $region8
    $region5: #{tpu_custom_call.1} parent=1 // loop_body
      %s21 = ssub.s32 %s16, 1
      %s22 = ssub.s32 %s16, 2
      %s23 = sadd.s32 %s16, 1
      %s25 = sadd.s32 %s24, 1
      %p28 = scmp.eq.s32.totalorder %s16, 3
      %p29 = scmp.ne.s32.totalorder %s24, %s26
      %p30 = scmp.eq.s32.totalorder %s16, 0
      %p31 = por %p29, %p30
      %p32 = scmp.ne.s32.totalorder %s24, %s26
      %p33 = scmp.eq.s32.totalorder %s21, 3
      %p34 = por %p32, %p33
      %p35 = scmp.ne.s32.totalorder %s26, %s27
      %p36 = scmp.eq.s32.totalorder %s21, 0
      %p37 = por %p35, %p36
      %p38 = scmp.ne.s32.totalorder %s26, %s27
      %p39 = scmp.eq.s32.totalorder %s22, 3
      %p40 = por %p38, %p39
      %p42 = scmp.ne.s32.totalorder %s27, %s41
      %p43 = scmp.eq.s32.totalorder %s22, 0
      %p44 = por %p42, %p43
      %s46 = sadd.s32 %s45, 1
      %p49 = scmp.eq.s32.totalorder %s16, 3
      %p50 = scmp.ne.s32.totalorder %s45, %s47
      %p51 = scmp.eq.s32.totalorder %s16, 0
      %p52 = por %p50, %p51
      %p53 = scmp.ne.s32.totalorder %s45, %s47
      %p54 = scmp.eq.s32.totalorder %s21, 3
      %p55 = por %p53, %p54
      %p56 = scmp.ne.s32.totalorder %s47, %s48
      %p57 = scmp.eq.s32.totalorder %s21, 0
      %p58 = por %p56, %p57
      %p59 = scmp.ne.s32.totalorder %s47, %s48
      %p60 = scmp.eq.s32.totalorder %s22, 3
      %p61 = por %p59, %p60
      %p63 = scmp.ne.s32.totalorder %s48, %s62
      %p64 = scmp.eq.s32.totalorder %s22, 0
      %p65 = por %p63, %p64
      %s66 = ssub.s32 %s16, %s23
      %p67 = scmp.eq.s32.totalorder %s66, 0
      %s69 = sadd.s32 %s68, 1
      %s70 = scalar_select %p67, %s68, %s69
      %p73 = pneg %p67
      %p74 = scmp.eq.s32.totalorder %s16, 3
      %p75 = por %p73, %p74
      %p76 = scmp.ne.s32.totalorder %s68, %s71
      %p77 = scmp.eq.s32.totalorder %s16, 0
      %p78 = por %p76, %p77
      %p79 = scmp.ne.s32.totalorder %s68, %s71
      %p80 = scmp.eq.s32.totalorder %s21, 3
      %p81 = por %p79, %p80
      %p82 = scmp.ne.s32.totalorder %s71, %s72
      %p83 = scmp.eq.s32.totalorder %s21, 0
      %p84 = por %p82, %p83
      %p85 = scmp.ne.s32.totalorder %s71, %s72
      %p86 = scmp.eq.s32.totalorder %s22, 3
      %p87 = por %p85, %p86
      %p89 = scmp.ne.s32.totalorder %s72, %s88
      %p90 = scmp.eq.s32.totalorder %s22, 0
      %p91 = por %p89, %p90
      %s93 = sadd.s32 %s92, 1
      %p96 = scmp.eq.s32.totalorder %s16, 3
      %p97 = scmp.ne.s32.totalorder %s92, %s94
      %p98 = scmp.eq.s32.totalorder %s16, 0
      %p99 = por %p97, %p98
      %p100 = scmp.ne.s32.totalorder %s92, %s94
      %p101 = scmp.eq.s32.totalorder %s21, 3
      %p102 = por %p100, %p101
      %p103 = scmp.ne.s32.totalorder %s94, %s95
      %p104 = scmp.eq.s32.totalorder %s21, 0
      %p105 = por %p103, %p104
      %p106 = scmp.ne.s32.totalorder %s94, %s95
      %p107 = scmp.eq.s32.totalorder %s22, 3
      %p108 = por %p106, %p107
      %p110 = scmp.ne.s32.totalorder %s95, %s109
      %p111 = scmp.eq.s32.totalorder %s22, 0
      %p112 = por %p110, %p111
      %s114 = sadd.s32 %s113, 1
      %p117 = scmp.eq.s32.totalorder %s16, 3
      %p118 = scmp.ne.s32.totalorder %s113, %s115
      %p119 = scmp.eq.s32.totalorder %s16, 0
      %p120 = por %p118, %p119
      %p121 = scmp.ne.s32.totalorder %s113, %s115
      %p122 = scmp.eq.s32.totalorder %s21, 3
      %p123 = por %p121, %p122
      %p124 = scmp.ne.s32.totalorder %s115, %s116
      %p125 = scmp.eq.s32.totalorder %s21, 0
      %p126 = por %p124, %p125
      %p127 = scmp.ne.s32.totalorder %s115, %s116
      %p128 = scmp.eq.s32.totalorder %s22, 3
      %p129 = por %p127, %p128
      %p131 = scmp.ne.s32.totalorder %s116, %s130
      %p132 = scmp.eq.s32.totalorder %s22, 0
      %p133 = por %p131, %p132
      %s135 = sadd.s32 %s134, 1
      %p138 = scmp.eq.s32.totalorder %s16, 3
      %p139 = scmp.ne.s32.totalorder %s134, %s136
      %p140 = scmp.eq.s32.totalorder %s16, 0
      %p141 = por %p139, %p140
      %p142 = scmp.ne.s32.totalorder %s134, %s136
      %p143 = scmp.eq.s32.totalorder %s21, 3
      %p144 = por %p142, %p143
      %p145 = scmp.ne.s32.totalorder %s136, %s137
      %p146 = scmp.eq.s32.totalorder %s21, 0
      %p147 = por %p145, %p146
      %p148 = scmp.ne.s32.totalorder %s136, %s137
      %p149 = scmp.eq.s32.totalorder %s22, 3
      %p150 = por %p148, %p149
      %p152 = scmp.ne.s32.totalorder %s137, %s151
      %p153 = scmp.eq.s32.totalorder %s22, 0
      %p154 = por %p152, %p153
      %s156 = sadd.s32 %s155, 1
      %p159 = scmp.eq.s32.totalorder %s16, 3
      %p160 = scmp.ne.s32.totalorder %s155, %s157
      %p161 = scmp.eq.s32.totalorder %s16, 0
      %p162 = por %p160, %p161
      %p163 = scmp.ne.s32.totalorder %s155, %s157
      %p164 = scmp.eq.s32.totalorder %s21, 3
      %p165 = por %p163, %p164
      %p166 = scmp.ne.s32.totalorder %s157, %s158
      %p167 = scmp.eq.s32.totalorder %s21, 0
      %p168 = por %p166, %p167
      %p169 = scmp.ne.s32.totalorder %s157, %s158
      %p170 = scmp.eq.s32.totalorder %s22, 3
      %p171 = por %p169, %p170
      %p173 = scmp.ne.s32.totalorder %s158, %s172
      %p174 = scmp.eq.s32.totalorder %s22, 0
      %p175 = por %p173, %p174
      %s176 = ssub.s32 %s16, %s23
      %p177 = scmp.eq.s32.totalorder %s176, 0
      %s179 = sadd.s32 %s178, 1
      %s180 = scalar_select %p177, %s178, %s179
      %p183 = pneg %p177
      %p184 = scmp.eq.s32.totalorder %s16, 3
      %p185 = por %p183, %p184
      %p186 = scmp.ne.s32.totalorder %s178, %s181
      %p187 = scmp.eq.s32.totalorder %s16, 0
      %p188 = por %p186, %p187
      %p189 = scmp.ne.s32.totalorder %s178, %s181
      %p190 = scmp.eq.s32.totalorder %s21, 3
      %p191 = por %p189, %p190
      %p192 = scmp.ne.s32.totalorder %s181, %s182
      %p193 = scmp.eq.s32.totalorder %s21, 0
      %p194 = por %p192, %p193
      %p195 = scmp.ne.s32.totalorder %s181, %s182
      %p196 = scmp.eq.s32.totalorder %s22, 3
      %p197 = por %p195, %p196
      %p199 = scmp.ne.s32.totalorder %s182, %s198
      %p200 = scmp.eq.s32.totalorder %s22, 0
      %p201 = por %p199, %p200
      %p202 = scmp.le.s32.totalorder 1, %s16
      %p203 = scmp.lt.s32.totalorder %s16, 5
      %p204 = pnand %p202, %p203
      %p205 = pneg %p204
      // Predicated region
      $region9: #{tpu_custom_call.1} parent=5 // pred_check
        _
      $region10: #{tpu_custom_call.1} parent=5 // pred_check_branch
        %207 = sbr.rel (%p204) target = $region12
      $region11: #{tpu_custom_call.1} parent=5 // pred_region
        %s208 = ssub.s32 %s16, 1
        // Predicated region
        $region13: #{tpu_custom_call.1} parent=11 // pred_check
          %p209 = pneg %p37
        $region14: #{tpu_custom_call.1} parent=11 // pred_check_branch
          %211 = sbr.rel (%p209) target = $region16
        $region15: #{tpu_custom_call.1} parent=11 // pred_region
          %s213 = ssub.s32 128, 128
          %214 = vsyncadd [#allocation3], %s213
          %s216 = sshll.u32 [#allocation2], 4
          %s217 = int_to_ptr.vmem [resolvable:$true] %s216
          %219 = dma.hbm_to_vmem [thread:$0]  %s0, 128, %s217, [#allocation3]
        $region16: #{tpu_custom_call.1} parent=11 // pred_fallthru
          _
        // Predicated region
        $region17: #{tpu_custom_call.1} parent=11 // pred_check
          %p220 = pneg %p58
        $region18: #{tpu_custom_call.1} parent=11 // pred_check_branch
          %222 = sbr.rel (%p220) target = $region20
        $region19: #{tpu_custom_call.1} parent=11 // pred_region
          %s224 = ssub.s32 128, 128
          %225 = vsyncadd [#allocation5], %s224
          %s227 = sshll.u32 [#allocation4], 4
          %s228 = int_to_ptr.vmem [resolvable:$true] %s227
          %230 = dma.hbm_to_vmem [thread:$0]  %s1, 128, %s228, [#allocation5]
        $region20: #{tpu_custom_call.1} parent=11 // pred_fallthru
          _
        // Predicated region
        $region21: #{tpu_custom_call.1} parent=11 // pred_check
          %p231 = pneg %p105
        $region22: #{tpu_custom_call.1} parent=11 // pred_check_branch
          %233 = sbr.rel (%p231) target = $region24
        $region23: #{tpu_custom_call.1} parent=11 // pred_region
          %s235 = ssub.s32 512, 512
          %236 = vsyncadd [#allocation5], %s235
          %s237 = sshll.u32 [#allocation7], 4
          %s238 = int_to_ptr.vmem [resolvable:$true] %s237
          %243 = dma.hbm_to_vmem [thread:$0]  %s3, 512, %s238, [#allocation5], 128, 128, 8
        $region24: #{tpu_custom_call.1} parent=11 // pred_fallthru
          _
        // Predicated region
        $region25: #{tpu_custom_call.1} parent=11 // pred_check
          %p244 = pneg %p126
        $region26: #{tpu_custom_call.1} parent=11 // pred_check_branch
          %246 = sbr.rel (%p244) target = $region28
        $region27: #{tpu_custom_call.1} parent=11 // pred_region
          _
        $region28: #{tpu_custom_call.1} parent=11 // pred_fallthru
          _
        // Predicated region
        $region29: #{tpu_custom_call.1} parent=11 // pred_check
          %p247 = pneg %p147
        $region30: #{tpu_custom_call.1} parent=11 // pred_check_branch
          %249 = sbr.rel (%p247) target = $region32
        $region31: #{tpu_custom_call.1} parent=11 // pred_region
          %s251 = ssub.s32 512, 512
          %252 = vsyncadd [#allocation9], %s251
          %s253 = sshll.u32 [#allocation8], 4
          %s254 = int_to_ptr.vmem [resolvable:$true] %s253
          %259 = dma.hbm_to_vmem [thread:$0]  %s5, 512, %s254, [#allocation9], 128, 128, 8
        $region32: #{tpu_custom_call.1} parent=11 // pred_fallthru
          _
        // Predicated region
        $region33: #{tpu_custom_call.1} parent=11 // pred_check
          %p260 = pneg %p168
        $region34: #{tpu_custom_call.1} parent=11 // pred_check_branch
          %262 = sbr.rel (%p260) target = $region36
        $region35: #{tpu_custom_call.1} parent=11 // pred_region
          _
        $region36: #{tpu_custom_call.1} parent=11 // pred_fallthru
          _
      $region12: #{tpu_custom_call.1} parent=5 // pred_fallthru
        _
      %p263 = scmp.lt.s32.totalorder %s16, 4
      // Predicated region
      $region37: #{tpu_custom_call.1} parent=5 // pred_check
        %p264 = pneg %p263
      $region38: #{tpu_custom_call.1} parent=5 // pred_check_branch
        %266 = sbr.rel (%p264) target = $region40
      $region39: #{tpu_custom_call.1} parent=5 // pred_region
        // Predicated region
        $region41: #{tpu_custom_call.1} parent=39 // pred_check
          %p267 = pneg %p78
        $region42: #{tpu_custom_call.1} parent=39 // pred_check_branch
          %269 = sbr.rel (%p267) target = $region44
        $region43: #{tpu_custom_call.1} parent=39 // pred_region
          %s270 = sand.u32 %s16, 1
          %s271 = scalar_lea.sflag [#allocation3], %s270
          %s272 = sand.u32 %s68, 1
          %s273 = smul.addr %s272, 32
          %s274 = scalar_lea.vmem [#allocation6], %s273
          %s275 = smul.u32 2, %s16
          %s277 = ssub.s32 512, 512
          %278 = vsyncadd %s271, %s277
          %s279 = smul.addr %s275, 2
          %s280 = smul.addr %s279, 128
          %s281 = scalar_lea.hbm %s2, %s280
          %s282 = sshll.u32 %s274, 4
          %s283 = int_to_ptr.vmem [resolvable:$true] %s282
          %288 = dma.hbm_to_vmem [thread:$0]  %s281, 512, %s283, %s271, 128, 128, 8
        $region44: #{tpu_custom_call.1} parent=39 // pred_fallthru
          _
      $region40: #{tpu_custom_call.1} parent=5 // pred_fallthru
        _
      %p289 = scmp.le.s32.totalorder 1, %s16
      %p290 = scmp.lt.s32.totalorder %s16, 5
      %p291 = pnand %p289, %p290
      %p292 = pneg %p291
      // Predicated region
      $region45: #{tpu_custom_call.1} parent=5 // pred_check
        _
      $region46: #{tpu_custom_call.1} parent=5 // pred_check_branch
        %294 = sbr.rel (%p291) target = $region48
      $region47: #{tpu_custom_call.1} parent=5 // pred_region
        %s295 = ssub.s32 %s16, 1
        // Predicated region
        $region49: #{tpu_custom_call.1} parent=47 // pred_check
          %p296 = pneg %p37
        $region50: #{tpu_custom_call.1} parent=47 // pred_check_branch
          %298 = sbr.rel (%p296) target = $region52
        $region51: #{tpu_custom_call.1} parent=47 // pred_region
          %299 = dma.done [#allocation3], 128
        $region52: #{tpu_custom_call.1} parent=47 // pred_fallthru
          _
        // Predicated region
        $region53: #{tpu_custom_call.1} parent=47 // pred_check
          %p300 = pneg %p58
        $region54: #{tpu_custom_call.1} parent=47 // pred_check_branch
          %302 = sbr.rel (%p300) target = $region56
        $region55: #{tpu_custom_call.1} parent=47 // pred_region
          %303 = dma.done [#allocation5], 128
        $region56: #{tpu_custom_call.1} parent=47 // pred_fallthru
          _
        %s304 = sand.u32 %s21, 1
        %s305 = scalar_lea.sflag [#allocation3], %s304
        %s306 = sand.u32 %s71, 1
        %s307 = smul.addr %s306, 32
        %s308 = scalar_lea.vmem [#allocation6], %s307
        // Predicated region
        $region57: #{tpu_custom_call.1} parent=47 // pred_check
          %p309 = pneg %p84
        $region58: #{tpu_custom_call.1} parent=47 // pred_check_branch
          %311 = sbr.rel (%p309) target = $region60
        $region59: #{tpu_custom_call.1} parent=47 // pred_region
          %312 = dma.done %s305, 512
        $region60: #{tpu_custom_call.1} parent=47 // pred_fallthru
          _
        // Predicated region
        $region61: #{tpu_custom_call.1} parent=47 // pred_check
          %p313 = pneg %p105
        $region62: #{tpu_custom_call.1} parent=47 // pred_check_branch
          %315 = sbr.rel (%p313) target = $region64
        $region63: #{tpu_custom_call.1} parent=47 // pred_region
          %316 = dma.done [#allocation5], 512
        $region64: #{tpu_custom_call.1} parent=47 // pred_fallthru
          _
        // Predicated region
        $region65: #{tpu_custom_call.1} parent=47 // pred_check
          %p317 = pneg %p147
        $region66: #{tpu_custom_call.1} parent=47 // pred_check_branch
          %319 = sbr.rel (%p317) target = $region68
        $region67: #{tpu_custom_call.1} parent=47 // pred_region
          %320 = dma.done [#allocation9], 512
        $region68: #{tpu_custom_call.1} parent=47 // pred_fallthru
          _
        %p321 = pneg %p37
        %p322 = pneg %p34
        %p323 = pneg %p58
        %p324 = pneg %p55
        %s325 = sand.u32 %s21, 1
        %s326 = scalar_lea.sflag [#allocation3], %s325
        %s327 = sand.u32 %s71, 1
        %s328 = smul.addr %s327, 32
        %s329 = scalar_lea.vmem [#allocation6], %s328
        %p330 = pneg %p84
        %p331 = pneg %p81
        %p332 = pneg %p105
        %p333 = pneg %p102
        %p334 = pneg %p126
        %p335 = pneg %p123
        %p336 = pneg %p147
        %p337 = pneg %p144
        %p338 = pneg %p168
        %p339 = pneg %p165
        %p340 = pneg %p194
        %p341 = pneg %p191
        %s342 = smul.u32 2, %s21
        %p343 = scmp.lt.s32.totalorder %s342, 7
        %s344 = scalar_select %p343, %s342, 7
        %s345 = smul.addr %s344, 8
        %s346 = scalar_lea.vmem %s7, %s345
        %s347 = smul.u32 2, %s21
        %s348 = smul.u32 2, %s21
        %p349 = scmp.lt.s32.totalorder %s348, 7
        %s350 = scalar_select %p349, %s348, 7
        %s351 = smul.addr %s350, 8
        %s352 = scalar_lea.vmem %s7, %s351
        %s353 = smul.u32 2, %s21
        %v354 = vld [vmem:[%s308] sm:$0xff]
        %v355 = vld [vmem:[%s308 + $0x8] sm:$0xff]
        %v356 = vld [vmem:[%s308 + $0x10] sm:$0xff]
        %v357 = vld [vmem:[%s308 + $0x18] sm:$0xff]
        %v358 = vld [vmem:[#allocation7] sm:$0xff]
        %v359 = vld [vmem:[#allocation7 + $0x8] sm:$0xff]
        %v360 = vld [vmem:[#allocation7 + $0x10] sm:$0xff]
        %v361 = vld [vmem:[#allocation7 + $0x18] sm:$0xff]
        %v362 = vld [vmem:[%s4] sm:$0x1]
        %v364 = vlaneseq
        %v365 = vshrl.u32 %v364, 7
        %v366 = vsub.s32 0, %v365
        %v367 = vrot.slane %v362, %v366
        %vm369 = vcmask 261120
        %v371 = vsel %vm369, %v354, 0
        %v374 = vsel %vm369, %v355, 0
        %v377 = vsel %vm369, %v356, 0
        %v380 = vsel %vm369, %v357, 0
        %382 = vmatprep.subr.mxu0 0.0
        %383 = vmatpush1.msra.mxu0 0.0
        %384 = vmatprep.subr.mxu0 0.0
        %385 = vmatpush1.msra.mxu0 0.0
        %386 = vmatprep.subr.mxu0 0.0
        %387 = vmatpush1.msra.mxu0 0.0
        %388 = vmatprep.subr.mxu0 0.0
        %389 = vmatpush1.msra.mxu0 0.0
        %390 = vmatprep.subr.mxu0 0.0
        %391 = vmatpush1.msra.mxu0 0.0
        %392 = vmatprep.subr.mxu0 0.0
        %393 = vmatpush1.msra.mxu0 0.0
        %394 = vmatprep.subr.mxu0 0.0
        %395 = vmatpush1.msra.mxu0 0.0
        %396 = vmatprep.subr.mxu0 0.0
        %397 = vmatpush1.msra.mxu0 0.0
        %398 = vmatprep.subr.mxu0 0.0
        %399 = vmatpush1.msra.mxu0 0.0
        %400 = vmatprep.subr.mxu0 0.0
        %401 = vmatpush1.msra.mxu0 0.0
        %402 = vmatprep.subr.mxu0 0.0
        %403 = vmatpush1.msra.mxu0 0.0
        %404 = vmatprep.subr.mxu0 0.0
        %405 = vmatpush1.msra.mxu0 0.0
        %406 = vmatprep.subr.mxu0 0.0
        %407 = vmatpush1.msra.mxu0 %v361
        %408 = vmatprep.subr.mxu0 0.0
        %409 = vmatpush1.msra.mxu0 %v360
        %410 = vmatprep.subr.mxu0 0.0
        %411 = vmatpush1.msra.mxu0 %v359
        %412 = vmatprep.subr.mxu0 0.0
        %413 = vmatpush1.msra.mxu0 %v358
        %414 = vmatprep.subr.mxu0 0.0
        %415 = vmatpush2.msra.mxu0 0.0
        %416 = vmatprep.subr.mxu0 0.0
        %417 = vmatpush2.msra.mxu0 0.0
        %418 = vmatprep.subr.mxu0 0.0
        %419 = vmatpush2.msra.mxu0 0.0
        %420 = vmatprep.subr.mxu0 0.0
        %421 = vmatpush2.msra.mxu0 0.0
        %422 = vmatprep.subr.mxu0 0.0
        %423 = vmatpush2.msra.mxu0 0.0
        %424 = vmatprep.subr.mxu0 0.0
        %425 = vmatpush2.msra.mxu0 0.0
        %426 = vmatprep.subr.mxu0 0.0
        %427 = vmatpush2.msra.mxu0 0.0
        %428 = vmatprep.subr.mxu0 0.0
        %429 = vmatpush2.msra.mxu0 0.0
        %430 = vmatprep.subr.mxu0 0.0
        %431 = vmatpush2.msra.mxu0 0.0
        %432 = vmatprep.subr.mxu0 0.0
        %433 = vmatpush2.msra.mxu0 0.0
        %434 = vmatprep.subr.mxu0 0.0
        %435 = vmatpush2.msra.mxu0 0.0
        %436 = vmatprep.subr.mxu0 0.0
        %437 = vmatpush2.msra.mxu0 0.0
        %438 = vmatprep.subr.mxu0 0.0
        %439 = vmatpush2.msra.mxu0 0.0
        %440 = vmatprep.subr.mxu0 0.0
        %441 = vmatpush2.msra.mxu0 0.0
        %442 = vmatprep.subr.mxu0 0.0
        %443 = vmatpush2.msra.mxu0 0.0
        %444 = vmatprep.subr.mxu0 0.0
        %445 = vmatpush2.msra.mxu0 0.0
        %446 = vmatprep.mubr.f32.mxu0 0.0
        %447 = vmatmul.mubr.f32.gmra.mxu0 %v371
        %v448 = vpop.f32.mrf.mxu0
        %v449 = vadd.f32 %v367, %v448
        %v450 = vpop.f32.mrf.mxu0
        %451 = vmatprep.mubr.f32.mxu0 0.0
        %452 = vmatmul.mubr.f32.gmra.mxu0 %v374
        %v453 = vpop.f32.mrf.mxu0
        %v454 = vadd.f32 %v367, %v453
        %v455 = vpop.f32.mrf.mxu0
        %456 = vmatprep.mubr.f32.mxu0 0.0
        %457 = vmatmul.mubr.f32.gmra.mxu0 %v377
        %v458 = vpop.f32.mrf.mxu0
        %v459 = vadd.f32 %v367, %v458
        %v460 = vpop.f32.mrf.mxu0
        %461 = vmatprep.mubr.f32.mxu0 0.0
        %462 = vmatmul.mubr.f32.gmra.mxu0 %v380
        %v463 = vpop.f32.mrf.mxu0
        %v464 = vadd.f32 %v367, %v463
        %v465 = vpop.f32.mrf.mxu0
        %466 = vdwg.mxu0
        %v467 = vld [vmem:[#allocation2] sm:$0xff]
        %v468 = vld [vmem:[#allocation4] sm:$0xff]
        %vm469 = vcmask 64512
        %v471 = vsel %vm469, %v468, 0
        %v474 = vsel %vm469, %v449, 0
        %v477 = vsel %vm469, %v454, 0
        %479 = vmatprep.subr.mxu0 0.0
        %480 = vmatpush1.xpose.msra.mxu0 0.0
        %481 = vmatprep.subr.mxu0 0.0
        %482 = vmatpush1.xpose.msra.mxu0 0.0
        %483 = vmatprep.subr.mxu0 0.0
        %484 = vmatpush1.xpose.msra.mxu0 0.0
        %485 = vmatprep.subr.mxu0 0.0
        %486 = vmatpush1.xpose.msra.mxu0 0.0
        %487 = vmatprep.subr.mxu0 0.0
        %488 = vmatpush1.xpose.msra.mxu0 0.0
        %489 = vmatprep.subr.mxu0 0.0
        %490 = vmatpush1.xpose.msra.mxu0 0.0
        %491 = vmatprep.subr.mxu0 0.0
        %492 = vmatpush1.xpose.msra.mxu0 0.0
        %493 = vmatprep.subr.mxu0 0.0
        %494 = vmatpush1.xpose.msra.mxu0 0.0
        %495 = vmatprep.subr.mxu0 0.0
        %496 = vmatpush1.xpose.msra.mxu0 0.0
        %497 = vmatprep.subr.mxu0 0.0
        %498 = vmatpush1.xpose.msra.mxu0 0.0
        %499 = vmatprep.subr.mxu0 0.0
        %500 = vmatpush1.xpose.msra.mxu0 0.0
        %501 = vmatprep.subr.mxu0 0.0
        %502 = vmatpush1.xpose.msra.mxu0 0.0
        %503 = vmatprep.subr.mxu0 0.0
        %504 = vmatpush1.xpose.msra.mxu0 0.0
        %505 = vmatprep.subr.mxu0 0.0
        %506 = vmatpush1.xpose.msra.mxu0 0.0
        %507 = vmatprep.subr.mxu0 0.0
        %508 = vmatpush1.xpose.msra.mxu0 %v477
        %509 = vmatprep.subr.mxu0 0.0
        %510 = vmatpush1.xpose.msra.mxu0 %v474
        %511 = vmatprep.subr.mxu0 0.0
        %512 = vmatpush2.xpose.msra.mxu0 0.0
        %513 = vmatprep.subr.mxu0 0.0
        %514 = vmatpush2.xpose.msra.mxu0 0.0
        %515 = vmatprep.subr.mxu0 0.0
        %516 = vmatpush2.xpose.msra.mxu0 0.0
        %517 = vmatprep.subr.mxu0 0.0
        %518 = vmatpush2.xpose.msra.mxu0 0.0
        %519 = vmatprep.subr.mxu0 0.0
        %520 = vmatpush2.xpose.msra.mxu0 0.0
        %521 = vmatprep.subr.mxu0 0.0
        %522 = vmatpush2.xpose.msra.mxu0 0.0
        %523 = vmatprep.subr.mxu0 0.0
        %524 = vmatpush2.xpose.msra.mxu0 0.0
        %525 = vmatprep.subr.mxu0 0.0
        %526 = vmatpush2.xpose.msra.mxu0 0.0
        %527 = vmatprep.subr.mxu0 0.0
        %528 = vmatpush2.xpose.msra.mxu0 0.0
        %529 = vmatprep.subr.mxu0 0.0
        %530 = vmatpush2.xpose.msra.mxu0 0.0
        %531 = vmatprep.subr.mxu0 0.0
        %532 = vmatpush2.xpose.msra.mxu0 0.0
        %533 = vmatprep.subr.mxu0 0.0
        %534 = vmatpush2.xpose.msra.mxu0 0.0
        %535 = vmatprep.subr.mxu0 0.0
        %536 = vmatpush2.xpose.msra.mxu0 0.0
        %537 = vmatprep.subr.mxu0 0.0
        %538 = vmatpush2.xpose.msra.mxu0 0.0
        %539 = vmatprep.subr.mxu0 0.0
        %540 = vmatpush2.xpose.msra.mxu0 0.0
        %541 = vmatprep.subr.mxu0 0.0
        %542 = vmatpush2.xpose.msra.mxu0 0.0
        %543 = vmatprep.mubr.f32.mxu0 0.0
        %544 = vmatmul.mubr.f32.gmra.mxu0 %v471
        %v545 = vpop.f32.mrf.mxu0
        %v546 = vadd.f32 0.0, %v545
        %v547 = vpop.f32.mrf.mxu0
        %548 = vdwg.mxu0
        %v550 = vsel %vm469, %v459, 0
        %v553 = vsel %vm469, %v464, 0
        %555 = vmatprep.subr.mxu0 0.0
        %556 = vmatpush1.xpose.msra.mxu0 0.0
        %557 = vmatprep.subr.mxu0 0.0
        %558 = vmatpush1.xpose.msra.mxu0 0.0
        %559 = vmatprep.subr.mxu0 0.0
        %560 = vmatpush1.xpose.msra.mxu0 0.0
        %561 = vmatprep.subr.mxu0 0.0
        %562 = vmatpush1.xpose.msra.mxu0 0.0
        %563 = vmatprep.subr.mxu0 0.0
        %564 = vmatpush1.xpose.msra.mxu0 0.0
        %565 = vmatprep.subr.mxu0 0.0
        %566 = vmatpush1.xpose.msra.mxu0 0.0
        %567 = vmatprep.subr.mxu0 0.0
        %568 = vmatpush1.xpose.msra.mxu0 0.0
        %569 = vmatprep.subr.mxu0 0.0
        %570 = vmatpush1.xpose.msra.mxu0 0.0
        %571 = vmatprep.subr.mxu0 0.0
        %572 = vmatpush1.xpose.msra.mxu0 0.0
        %573 = vmatprep.subr.mxu0 0.0
        %574 = vmatpush1.xpose.msra.mxu0 0.0
        %575 = vmatprep.subr.mxu0 0.0
        %576 = vmatpush1.xpose.msra.mxu0 0.0
        %577 = vmatprep.subr.mxu0 0.0
        %578 = vmatpush1.xpose.msra.mxu0 0.0
        %579 = vmatprep.subr.mxu0 0.0
        %580 = vmatpush1.xpose.msra.mxu0 0.0
        %581 = vmatprep.subr.mxu0 0.0
        %582 = vmatpush1.xpose.msra.mxu0 0.0
        %583 = vmatprep.subr.mxu0 0.0
        %584 = vmatpush1.xpose.msra.mxu0 %v553
        %585 = vmatprep.subr.mxu0 0.0
        %586 = vmatpush1.xpose.msra.mxu0 %v550
        %587 = vmatprep.subr.mxu0 0.0
        %588 = vmatpush2.xpose.msra.mxu0 0.0
        %589 = vmatprep.subr.mxu0 0.0
        %590 = vmatpush2.xpose.msra.mxu0 0.0
        %591 = vmatprep.subr.mxu0 0.0
        %592 = vmatpush2.xpose.msra.mxu0 0.0
        %593 = vmatprep.subr.mxu0 0.0
        %594 = vmatpush2.xpose.msra.mxu0 0.0
        %595 = vmatprep.subr.mxu0 0.0
        %596 = vmatpush2.xpose.msra.mxu0 0.0
        %597 = vmatprep.subr.mxu0 0.0
        %598 = vmatpush2.xpose.msra.mxu0 0.0
        %599 = vmatprep.subr.mxu0 0.0
        %600 = vmatpush2.xpose.msra.mxu0 0.0
        %601 = vmatprep.subr.mxu0 0.0
        %602 = vmatpush2.xpose.msra.mxu0 0.0
        %603 = vmatprep.subr.mxu0 0.0
        %604 = vmatpush2.xpose.msra.mxu0 0.0
        %605 = vmatprep.subr.mxu0 0.0
        %606 = vmatpush2.xpose.msra.mxu0 0.0
        %607 = vmatprep.subr.mxu0 0.0
        %608 = vmatpush2.xpose.msra.mxu0 0.0
        %609 = vmatprep.subr.mxu0 0.0
        %610 = vmatpush2.xpose.msra.mxu0 0.0
        %611 = vmatprep.subr.mxu0 0.0
        %612 = vmatpush2.xpose.msra.mxu0 0.0
        %613 = vmatprep.subr.mxu0 0.0
        %614 = vmatpush2.xpose.msra.mxu0 0.0
        %615 = vmatprep.subr.mxu0 0.0
        %616 = vmatpush2.xpose.msra.mxu0 0.0
        %617 = vmatprep.subr.mxu0 0.0
        %618 = vmatpush2.xpose.msra.mxu0 0.0
        %619 = vmatprep.mubr.f32.mxu0 0.0
        %620 = vmatmul.mubr.f32.gmra.mxu0 %v471
        %v621 = vpop.f32.mrf.mxu0
        %v622 = vadd.f32 0.0, %v621
        %v623 = vpop.f32.mrf.mxu0
        %624 = vdwg.mxu0
        %vm625 = vcmask 130048
        %v626 = vsel %vm625, %v546, -inf
        %v627 = vrot.slane %v626, 4
        %v628 = vmax.f32 %v626, %v627
        %v629 = vrot.slane %v628, 2
        %v630 = vmax.f32 %v628, %v629
        %v631 = vrot.slane %v630, 1
        %v632 = vmax.f32 %v630, %v631
        %v633 = vsel %vm625, %v622, -inf
        %v634 = vrot.slane %v633, 4
        %v635 = vmax.f32 %v633, %v634
        %v636 = vrot.slane %v635, 2
        %v637 = vmax.f32 %v635, %v636
        %v638 = vrot.slane %v637, 1
        %v639 = vmax.f32 %v637, %v638
        %v640 = vsub.f32 %v546, %v632
        %v641 = vsub.f32 %v622, %v639
        %v642 = vmul.f32 %v640, 1.442695
        %v643 = vpow.pop %v642
        %v644 = vmul.f32 %v641, 1.442695
        %v645 = vpow.pop %v644
        %v646 = vsel %vm625, %v643, 0.0
        %v647 = vrot.slane %v646, 4
        %v648 = vadd.f32 %v646, %v647
        %v649 = vrot.slane %v648, 2
        %v650 = vadd.f32 %v648, %v649
        %v651 = vrot.slane %v650, 1
        %v652 = vadd.f32 %v650, %v651
        %v653 = vsel %vm625, %v645, 0.0
        %v654 = vrot.slane %v653, 4
        %v655 = vadd.f32 %v653, %v654
        %v656 = vrot.slane %v655, 2
        %v657 = vadd.f32 %v655, %v656
        %v658 = vrot.slane %v657, 1
        %v659 = vadd.f32 %v657, %v658
        %v660 = vrcp.pop %v652
        %v661 = vrcp.pop %v659
        %v662 = vmul.f32 %v643, %v660
        %v663 = vmul.f32 %v645, %v661
        %664 = vrot.lane.b32.xlu0 %v449, 96
        %v665 = vpop.permute.xlu0 %664
        %666 = vrot.lane.b32.xlu0 %v454, 96
        %v667 = vpop.permute.xlu0 %666
        %v671 = vsel %vm625, %v662, 0
        %673 = vmatprep.subr.mxu0 0.0
        %674 = vmatpush1.msra.mxu0 0.0
        %675 = vmatprep.subr.mxu0 0.0
        %676 = vmatpush1.msra.mxu0 0.0
        %677 = vmatprep.subr.mxu0 0.0
        %678 = vmatpush1.msra.mxu0 0.0
        %679 = vmatprep.subr.mxu0 0.0
        %680 = vmatpush1.msra.mxu0 0.0
        %681 = vmatprep.subr.mxu0 0.0
        %682 = vmatpush1.msra.mxu0 0.0
        %683 = vmatprep.subr.mxu0 0.0
        %684 = vmatpush1.msra.mxu0 0.0
        %685 = vmatprep.subr.mxu0 0.0
        %686 = vmatpush1.msra.mxu0 0.0
        %687 = vmatprep.subr.mxu0 0.0
        %688 = vmatpush1.msra.mxu0 0.0
        %689 = vmatprep.subr.mxu0 0.0
        %690 = vmatpush1.msra.mxu0 0.0
        %691 = vmatprep.subr.mxu0 0.0
        %692 = vmatpush1.msra.mxu0 0.0
        %693 = vmatprep.subr.mxu0 0.0
        %694 = vmatpush1.msra.mxu0 0.0
        %695 = vmatprep.subr.mxu0 0.0
        %696 = vmatpush1.msra.mxu0 0.0
        %697 = vmatprep.subr.mxu0 0.0
        %698 = vmatpush1.msra.mxu0 0.0
        %699 = vmatprep.subr.mxu0 0.0
        %700 = vmatpush1.msra.mxu0 0.0
        %701 = vmatprep.subr.mxu0 0.0
        %702 = vmatpush1.msra.mxu0 %v667
        %703 = vmatprep.subr.mxu0 0.0
        %704 = vmatpush1.msra.mxu0 %v665
        %705 = vmatprep.subr.mxu0 0.0
        %706 = vmatpush2.msra.mxu0 0.0
        %707 = vmatprep.subr.mxu0 0.0
        %708 = vmatpush2.msra.mxu0 0.0
        %709 = vmatprep.subr.mxu0 0.0
        %710 = vmatpush2.msra.mxu0 0.0
        %711 = vmatprep.subr.mxu0 0.0
        %712 = vmatpush2.msra.mxu0 0.0
        %713 = vmatprep.subr.mxu0 0.0
        %714 = vmatpush2.msra.mxu0 0.0
        %715 = vmatprep.subr.mxu0 0.0
        %716 = vmatpush2.msra.mxu0 0.0
        %717 = vmatprep.subr.mxu0 0.0
        %718 = vmatpush2.msra.mxu0 0.0
        %719 = vmatprep.subr.mxu0 0.0
        %720 = vmatpush2.msra.mxu0 0.0
        %721 = vmatprep.subr.mxu0 0.0
        %722 = vmatpush2.msra.mxu0 0.0
        %723 = vmatprep.subr.mxu0 0.0
        %724 = vmatpush2.msra.mxu0 0.0
        %725 = vmatprep.subr.mxu0 0.0
        %726 = vmatpush2.msra.mxu0 0.0
        %727 = vmatprep.subr.mxu0 0.0
        %728 = vmatpush2.msra.mxu0 0.0
        %729 = vmatprep.subr.mxu0 0.0
        %730 = vmatpush2.msra.mxu0 0.0
        %731 = vmatprep.subr.mxu0 0.0
        %732 = vmatpush2.msra.mxu0 0.0
        %733 = vmatprep.subr.mxu0 0.0
        %734 = vmatpush2.msra.mxu0 0.0
        %735 = vmatprep.subr.mxu0 0.0
        %736 = vmatpush2.msra.mxu0 0.0
        %737 = vmatprep.mubr.f32.mxu0 0.0
        %738 = vmatmul.mubr.f32.gmra.mxu0 %v671
        %v739 = vpop.f32.mrf.mxu0
        %v740 = vadd.f32 0.0, %v739
        %v741 = vpop.f32.mrf.mxu0
        %742 = vdwg.mxu0
        %743 = vrot.lane.b32.xlu0 %v459, 96
        %v744 = vpop.permute.xlu0 %743
        %745 = vrot.lane.b32.xlu0 %v464, 96
        %v746 = vpop.permute.xlu0 %745
        %v750 = vsel %vm625, %v663, 0
        %752 = vmatprep.subr.mxu0 0.0
        %753 = vmatpush1.msra.mxu0 0.0
        %754 = vmatprep.subr.mxu0 0.0
        %755 = vmatpush1.msra.mxu0 0.0
        %756 = vmatprep.subr.mxu0 0.0
        %757 = vmatpush1.msra.mxu0 0.0
        %758 = vmatprep.subr.mxu0 0.0
        %759 = vmatpush1.msra.mxu0 0.0
        %760 = vmatprep.subr.mxu0 0.0
        %761 = vmatpush1.msra.mxu0 0.0
        %762 = vmatprep.subr.mxu0 0.0
        %763 = vmatpush1.msra.mxu0 0.0
        %764 = vmatprep.subr.mxu0 0.0
        %765 = vmatpush1.msra.mxu0 0.0
        %766 = vmatprep.subr.mxu0 0.0
        %767 = vmatpush1.msra.mxu0 0.0
        %768 = vmatprep.subr.mxu0 0.0
        %769 = vmatpush1.msra.mxu0 0.0
        %770 = vmatprep.subr.mxu0 0.0
        %771 = vmatpush1.msra.mxu0 0.0
        %772 = vmatprep.subr.mxu0 0.0
        %773 = vmatpush1.msra.mxu0 0.0
        %774 = vmatprep.subr.mxu0 0.0
        %775 = vmatpush1.msra.mxu0 0.0
        %776 = vmatprep.subr.mxu0 0.0
        %777 = vmatpush1.msra.mxu0 0.0
        %778 = vmatprep.subr.mxu0 0.0
        %779 = vmatpush1.msra.mxu0 0.0
        %780 = vmatprep.subr.mxu0 0.0
        %781 = vmatpush1.msra.mxu0 %v746
        %782 = vmatprep.subr.mxu0 0.0
        %783 = vmatpush1.msra.mxu0 %v744
        %784 = vmatprep.subr.mxu0 0.0
        %785 = vmatpush2.msra.mxu0 0.0
        %786 = vmatprep.subr.mxu0 0.0
        %787 = vmatpush2.msra.mxu0 0.0
        %788 = vmatprep.subr.mxu0 0.0
        %789 = vmatpush2.msra.mxu0 0.0
        %790 = vmatprep.subr.mxu0 0.0
        %791 = vmatpush2.msra.mxu0 0.0
        %792 = vmatprep.subr.mxu0 0.0
        %793 = vmatpush2.msra.mxu0 0.0
        %794 = vmatprep.subr.mxu0 0.0
        %795 = vmatpush2.msra.mxu0 0.0
        %796 = vmatprep.subr.mxu0 0.0
        %797 = vmatpush2.msra.mxu0 0.0
        %798 = vmatprep.subr.mxu0 0.0
        %799 = vmatpush2.msra.mxu0 0.0
        %800 = vmatprep.subr.mxu0 0.0
        %801 = vmatpush2.msra.mxu0 0.0
        %802 = vmatprep.subr.mxu0 0.0
        %803 = vmatpush2.msra.mxu0 0.0
        %804 = vmatprep.subr.mxu0 0.0
        %805 = vmatpush2.msra.mxu0 0.0
        %806 = vmatprep.subr.mxu0 0.0
        %807 = vmatpush2.msra.mxu0 0.0
        %808 = vmatprep.subr.mxu0 0.0
        %809 = vmatpush2.msra.mxu0 0.0
        %810 = vmatprep.subr.mxu0 0.0
        %811 = vmatpush2.msra.mxu0 0.0
        %812 = vmatprep.subr.mxu0 0.0
        %813 = vmatpush2.msra.mxu0 0.0
        %814 = vmatprep.subr.mxu0 0.0
        %815 = vmatpush2.msra.mxu0 0.0
        %816 = vmatprep.mubr.f32.mxu0 0.0
        %817 = vmatmul.mubr.f32.gmra.mxu0 %v750
        %v818 = vpop.f32.mrf.mxu0
        %v819 = vadd.f32 0.0, %v818
        %v820 = vpop.f32.mrf.mxu0
        %821 = vdwg.mxu0
        %v822 = vadd.f32 %v467, %v740
        %v823 = vadd.f32 %v467, %v819
        %824 = vrot.lane.b32.xlu0 %v468, 120
        %v825 = vpop.permute.xlu0 %824
        %826 = vrot.lane.b32.xlu0 %v449, 120
        %v827 = vpop.permute.xlu0 %826
        %828 = vrot.lane.b32.xlu0 %v454, 120
        %v829 = vpop.permute.xlu0 %828
        %v830 = vsel %vm469, %v825, 0
        %v832 = vsel %vm469, %v827, 0
        %v834 = vsel %vm469, %v829, 0
        %836 = vmatprep.subr.mxu0 0.0
        %837 = vmatpush1.xpose.msra.mxu0 0.0
        %838 = vmatprep.subr.mxu0 0.0
        %839 = vmatpush1.xpose.msra.mxu0 0.0
        %840 = vmatprep.subr.mxu0 0.0
        %841 = vmatpush1.xpose.msra.mxu0 0.0
        %842 = vmatprep.subr.mxu0 0.0
        %843 = vmatpush1.xpose.msra.mxu0 0.0
        %844 = vmatprep.subr.mxu0 0.0
        %845 = vmatpush1.xpose.msra.mxu0 0.0
        %846 = vmatprep.subr.mxu0 0.0
        %847 = vmatpush1.xpose.msra.mxu0 0.0
        %848 = vmatprep.subr.mxu0 0.0
        %849 = vmatpush1.xpose.msra.mxu0 0.0
        %850 = vmatprep.subr.mxu0 0.0
        %851 = vmatpush1.xpose.msra.mxu0 0.0
        %852 = vmatprep.subr.mxu0 0.0
        %853 = vmatpush1.xpose.msra.mxu0 0.0
        %854 = vmatprep.subr.mxu0 0.0
        %855 = vmatpush1.xpose.msra.mxu0 0.0
        %856 = vmatprep.subr.mxu0 0.0
        %857 = vmatpush1.xpose.msra.mxu0 0.0
        %858 = vmatprep.subr.mxu0 0.0
        %859 = vmatpush1.xpose.msra.mxu0 0.0
        %860 = vmatprep.subr.mxu0 0.0
        %861 = vmatpush1.xpose.msra.mxu0 0.0
        %862 = vmatprep.subr.mxu0 0.0
        %863 = vmatpush1.xpose.msra.mxu0 0.0
        %864 = vmatprep.subr.mxu0 0.0
        %865 = vmatpush1.xpose.msra.mxu0 %v834
        %866 = vmatprep.subr.mxu0 0.0
        %867 = vmatpush1.xpose.msra.mxu0 %v832
        %868 = vmatprep.subr.mxu0 0.0
        %869 = vmatpush2.xpose.msra.mxu0 0.0
        %870 = vmatprep.subr.mxu0 0.0
        %871 = vmatpush2.xpose.msra.mxu0 0.0
        %872 = vmatprep.subr.mxu0 0.0
        %873 = vmatpush2.xpose.msra.mxu0 0.0
        %874 = vmatprep.subr.mxu0 0.0
        %875 = vmatpush2.xpose.msra.mxu0 0.0
        %876 = vmatprep.subr.mxu0 0.0
        %877 = vmatpush2.xpose.msra.mxu0 0.0
        %878 = vmatprep.subr.mxu0 0.0
        %879 = vmatpush2.xpose.msra.mxu0 0.0
        %880 = vmatprep.subr.mxu0 0.0
        %881 = vmatpush2.xpose.msra.mxu0 0.0
        %882 = vmatprep.subr.mxu0 0.0
        %883 = vmatpush2.xpose.msra.mxu0 0.0
        %884 = vmatprep.subr.mxu0 0.0
        %885 = vmatpush2.xpose.msra.mxu0 0.0
        %886 = vmatprep.subr.mxu0 0.0
        %887 = vmatpush2.xpose.msra.mxu0 0.0
        %888 = vmatprep.subr.mxu0 0.0
        %889 = vmatpush2.xpose.msra.mxu0 0.0
        %890 = vmatprep.subr.mxu0 0.0
        %891 = vmatpush2.xpose.msra.mxu0 0.0
        %892 = vmatprep.subr.mxu0 0.0
        %893 = vmatpush2.xpose.msra.mxu0 0.0
        %894 = vmatprep.subr.mxu0 0.0
        %895 = vmatpush2.xpose.msra.mxu0 0.0
        %896 = vmatprep.subr.mxu0 0.0
        %897 = vmatpush2.xpose.msra.mxu0 0.0
        %898 = vmatprep.subr.mxu0 0.0
        %899 = vmatpush2.xpose.msra.mxu0 0.0
        %900 = vmatprep.mubr.f32.mxu0 0.0
        %901 = vmatmul.mubr.f32.gmra.mxu0 %v830
        %v902 = vpop.f32.mrf.mxu0
        %v903 = vadd.f32 0.0, %v902
        %v904 = vpop.f32.mrf.mxu0
        %905 = vdwg.mxu0
        %906 = vrot.lane.b32.xlu0 %v459, 120
        %v907 = vpop.permute.xlu0 %906
        %908 = vrot.lane.b32.xlu0 %v464, 120
        %v909 = vpop.permute.xlu0 %908
        %v910 = vsel %vm469, %v907, 0
        %v912 = vsel %vm469, %v909, 0
        %914 = vmatprep.subr.mxu0 0.0
        %915 = vmatpush1.xpose.msra.mxu0 0.0
        %916 = vmatprep.subr.mxu0 0.0
        %917 = vmatpush1.xpose.msra.mxu0 0.0
        %918 = vmatprep.subr.mxu0 0.0
        %919 = vmatpush1.xpose.msra.mxu0 0.0
        %920 = vmatprep.subr.mxu0 0.0
        %921 = vmatpush1.xpose.msra.mxu0 0.0
        %922 = vmatprep.subr.mxu0 0.0
        %923 = vmatpush1.xpose.msra.mxu0 0.0
        %924 = vmatprep.subr.mxu0 0.0
        %925 = vmatpush1.xpose.msra.mxu0 0.0
        %926 = vmatprep.subr.mxu0 0.0
        %927 = vmatpush1.xpose.msra.mxu0 0.0
        %928 = vmatprep.subr.mxu0 0.0
        %929 = vmatpush1.xpose.msra.mxu0 0.0
        %930 = vmatprep.subr.mxu0 0.0
        %931 = vmatpush1.xpose.msra.mxu0 0.0
        %932 = vmatprep.subr.mxu0 0.0
        %933 = vmatpush1.xpose.msra.mxu0 0.0
        %934 = vmatprep.subr.mxu0 0.0
        %935 = vmatpush1.xpose.msra.mxu0 0.0
        %936 = vmatprep.subr.mxu0 0.0
        %937 = vmatpush1.xpose.msra.mxu0 0.0
        %938 = vmatprep.subr.mxu0 0.0
        %939 = vmatpush1.xpose.msra.mxu0 0.0
        %940 = vmatprep.subr.mxu0 0.0
        %941 = vmatpush1.xpose.msra.mxu0 0.0
        %942 = vmatprep.subr.mxu0 0.0
        %943 = vmatpush1.xpose.msra.mxu0 %v912
        %944 = vmatprep.subr.mxu0 0.0
        %945 = vmatpush1.xpose.msra.mxu0 %v910
        %946 = vmatprep.subr.mxu0 0.0
        %947 = vmatpush2.xpose.msra.mxu0 0.0
        %948 = vmatprep.subr.mxu0 0.0
        %949 = vmatpush2.xpose.msra.mxu0 0.0
        %950 = vmatprep.subr.mxu0 0.0
        %951 = vmatpush2.xpose.msra.mxu0 0.0
        %952 = vmatprep.subr.mxu0 0.0
        %953 = vmatpush2.xpose.msra.mxu0 0.0
        %954 = vmatprep.subr.mxu0 0.0
        %955 = vmatpush2.xpose.msra.mxu0 0.0
        %956 = vmatprep.subr.mxu0 0.0
        %957 = vmatpush2.xpose.msra.mxu0 0.0
        %958 = vmatprep.subr.mxu0 0.0
        %959 = vmatpush2.xpose.msra.mxu0 0.0
        %960 = vmatprep.subr.mxu0 0.0
        %961 = vmatpush2.xpose.msra.mxu0 0.0
        %962 = vmatprep.subr.mxu0 0.0
        %963 = vmatpush2.xpose.msra.mxu0 0.0
        %964 = vmatprep.subr.mxu0 0.0
        %965 = vmatpush2.xpose.msra.mxu0 0.0
        %966 = vmatprep.subr.mxu0 0.0
        %967 = vmatpush2.xpose.msra.mxu0 0.0
        %968 = vmatprep.subr.mxu0 0.0
        %969 = vmatpush2.xpose.msra.mxu0 0.0
        %970 = vmatprep.subr.mxu0 0.0
        %971 = vmatpush2.xpose.msra.mxu0 0.0
        %972 = vmatprep.subr.mxu0 0.0
        %973 = vmatpush2.xpose.msra.mxu0 0.0
        %974 = vmatprep.subr.mxu0 0.0
        %975 = vmatpush2.xpose.msra.mxu0 0.0
        %976 = vmatprep.subr.mxu0 0.0
        %977 = vmatpush2.xpose.msra.mxu0 0.0
        %978 = vmatprep.mubr.f32.mxu0 0.0
        %979 = vmatmul.mubr.f32.gmra.mxu0 %v830
        %v980 = vpop.f32.mrf.mxu0
        %v981 = vadd.f32 0.0, %v980
        %v982 = vpop.f32.mrf.mxu0
        %983 = vdwg.mxu0
        %v984 = vsel %vm625, %v903, -inf
        %v985 = vrot.slane %v984, 4
        %v986 = vmax.f32 %v984, %v985
        %v987 = vrot.slane %v986, 2
        %v988 = vmax.f32 %v986, %v987
        %v989 = vrot.slane %v988, 1
        %v990 = vmax.f32 %v988, %v989
        %v991 = vsel %vm625, %v981, -inf
        %v992 = vrot.slane %v991, 4
        %v993 = vmax.f32 %v991, %v992
        %v994 = vrot.slane %v993, 2
        %v995 = vmax.f32 %v993, %v994
        %v996 = vrot.slane %v995, 1
        %v997 = vmax.f32 %v995, %v996
        %v998 = vsub.f32 %v903, %v990
        %v999 = vsub.f32 %v981, %v997
        %v1000 = vmul.f32 %v998, 1.442695
        %v1001 = vpow.pop %v1000
        %v1002 = vmul.f32 %v999, 1.442695
        %v1003 = vpow.pop %v1002
        %v1004 = vsel %vm625, %v1001, 0.0
        %v1005 = vrot.slane %v1004, 4
        %v1006 = vadd.f32 %v1004, %v1005
        %v1007 = vrot.slane %v1006, 2
        %v1008 = vadd.f32 %v1006, %v1007
        %v1009 = vrot.slane %v1008, 1
        %v1010 = vadd.f32 %v1008, %v1009
        %v1011 = vsel %vm625, %v1003, 0.0
        %v1012 = vrot.slane %v1011, 4
        %v1013 = vadd.f32 %v1011, %v1012
        %v1014 = vrot.slane %v1013, 2
        %v1015 = vadd.f32 %v1013, %v1014
        %v1016 = vrot.slane %v1015, 1
        %v1017 = vadd.f32 %v1015, %v1016
        %v1018 = vrcp.pop %v1010
        %v1019 = vrcp.pop %v1017
        %v1020 = vmul.f32 %v1001, %v1018
        %v1021 = vmul.f32 %v1003, %v1019
        %1022 = vrot.lane.b32.xlu0 %v449, 88
        %v1023 = vpop.permute.xlu0 %1022
        %1024 = vrot.lane.b32.xlu0 %v454, 88
        %v1025 = vpop.permute.xlu0 %1024
        %v1029 = vsel %vm625, %v1020, 0
        %1031 = vmatprep.subr.mxu0 0.0
        %1032 = vmatpush1.msra.mxu0 0.0
        %1033 = vmatprep.subr.mxu0 0.0
        %1034 = vmatpush1.msra.mxu0 0.0
        %1035 = vmatprep.subr.mxu0 0.0
        %1036 = vmatpush1.msra.mxu0 0.0
        %1037 = vmatprep.subr.mxu0 0.0
        %1038 = vmatpush1.msra.mxu0 0.0
        %1039 = vmatprep.subr.mxu0 0.0
        %1040 = vmatpush1.msra.mxu0 0.0
        %1041 = vmatprep.subr.mxu0 0.0
        %1042 = vmatpush1.msra.mxu0 0.0
        %1043 = vmatprep.subr.mxu0 0.0
        %1044 = vmatpush1.msra.mxu0 0.0
        %1045 = vmatprep.subr.mxu0 0.0
        %1046 = vmatpush1.msra.mxu0 0.0
        %1047 = vmatprep.subr.mxu0 0.0
        %1048 = vmatpush1.msra.mxu0 0.0
        %1049 = vmatprep.subr.mxu0 0.0
        %1050 = vmatpush1.msra.mxu0 0.0
        %1051 = vmatprep.subr.mxu0 0.0
        %1052 = vmatpush1.msra.mxu0 0.0
        %1053 = vmatprep.subr.mxu0 0.0
        %1054 = vmatpush1.msra.mxu0 0.0
        %1055 = vmatprep.subr.mxu0 0.0
        %1056 = vmatpush1.msra.mxu0 0.0
        %1057 = vmatprep.subr.mxu0 0.0
        %1058 = vmatpush1.msra.mxu0 0.0
        %1059 = vmatprep.subr.mxu0 0.0
        %1060 = vmatpush1.msra.mxu0 %v1025
        %1061 = vmatprep.subr.mxu0 0.0
        %1062 = vmatpush1.msra.mxu0 %v1023
        %1063 = vmatprep.subr.mxu0 0.0
        %1064 = vmatpush2.msra.mxu0 0.0
        %1065 = vmatprep.subr.mxu0 0.0
        %1066 = vmatpush2.msra.mxu0 0.0
        %1067 = vmatprep.subr.mxu0 0.0
        %1068 = vmatpush2.msra.mxu0 0.0
        %1069 = vmatprep.subr.mxu0 0.0
        %1070 = vmatpush2.msra.mxu0 0.0
        %1071 = vmatprep.subr.mxu0 0.0
        %1072 = vmatpush2.msra.mxu0 0.0
        %1073 = vmatprep.subr.mxu0 0.0
        %1074 = vmatpush2.msra.mxu0 0.0
        %1075 = vmatprep.subr.mxu0 0.0
        %1076 = vmatpush2.msra.mxu0 0.0
        %1077 = vmatprep.subr.mxu0 0.0
        %1078 = vmatpush2.msra.mxu0 0.0
        %1079 = vmatprep.subr.mxu0 0.0
        %1080 = vmatpush2.msra.mxu0 0.0
        %1081 = vmatprep.subr.mxu0 0.0
        %1082 = vmatpush2.msra.mxu0 0.0
        %1083 = vmatprep.subr.mxu0 0.0
        %1084 = vmatpush2.msra.mxu0 0.0
        %1085 = vmatprep.subr.mxu0 0.0
        %1086 = vmatpush2.msra.mxu0 0.0
        %1087 = vmatprep.subr.mxu0 0.0
        %1088 = vmatpush2.msra.mxu0 0.0
        %1089 = vmatprep.subr.mxu0 0.0
        %1090 = vmatpush2.msra.mxu0 0.0
        %1091 = vmatprep.subr.mxu0 0.0
        %1092 = vmatpush2.msra.mxu0 0.0
        %1093 = vmatprep.subr.mxu0 0.0
        %1094 = vmatpush2.msra.mxu0 0.0
        %1095 = vmatprep.mubr.f32.mxu0 0.0
        %1096 = vmatmul.mubr.f32.gmra.mxu0 %v1029
        %v1097 = vpop.f32.mrf.mxu0
        %v1098 = vadd.f32 0.0, %v1097
        %v1099 = vpop.f32.mrf.mxu0
        %1100 = vdwg.mxu0
        %1101 = vrot.lane.b32.xlu0 %v459, 88
        %v1102 = vpop.permute.xlu0 %1101
        %1103 = vrot.lane.b32.xlu0 %v464, 88
        %v1104 = vpop.permute.xlu0 %1103
        %v1108 = vsel %vm625, %v1021, 0
        %1110 = vmatprep.subr.mxu0 0.0
        %1111 = vmatpush1.msra.mxu0 0.0
        %1112 = vmatprep.subr.mxu0 0.0
        %1113 = vmatpush1.msra.mxu0 0.0
        %1114 = vmatprep.subr.mxu0 0.0
        %1115 = vmatpush1.msra.mxu0 0.0
        %1116 = vmatprep.subr.mxu0 0.0
        %1117 = vmatpush1.msra.mxu0 0.0
        %1118 = vmatprep.subr.mxu0 0.0
        %1119 = vmatpush1.msra.mxu0 0.0
        %1120 = vmatprep.subr.mxu0 0.0
        %1121 = vmatpush1.msra.mxu0 0.0
        %1122 = vmatprep.subr.mxu0 0.0
        %1123 = vmatpush1.msra.mxu0 0.0
        %1124 = vmatprep.subr.mxu0 0.0
        %1125 = vmatpush1.msra.mxu0 0.0
        %1126 = vmatprep.subr.mxu0 0.0
        %1127 = vmatpush1.msra.mxu0 0.0
        %1128 = vmatprep.subr.mxu0 0.0
        %1129 = vmatpush1.msra.mxu0 0.0
        %1130 = vmatprep.subr.mxu0 0.0
        %1131 = vmatpush1.msra.mxu0 0.0
        %1132 = vmatprep.subr.mxu0 0.0
        %1133 = vmatpush1.msra.mxu0 0.0
        %1134 = vmatprep.subr.mxu0 0.0
        %1135 = vmatpush1.msra.mxu0 0.0
        %1136 = vmatprep.subr.mxu0 0.0
        %1137 = vmatpush1.msra.mxu0 0.0
        %1138 = vmatprep.subr.mxu0 0.0
        %1139 = vmatpush1.msra.mxu0 %v1104
        %1140 = vmatprep.subr.mxu0 0.0
        %1141 = vmatpush1.msra.mxu0 %v1102
        %1142 = vmatprep.subr.mxu0 0.0
        %1143 = vmatpush2.msra.mxu0 0.0
        %1144 = vmatprep.subr.mxu0 0.0
        %1145 = vmatpush2.msra.mxu0 0.0
        %1146 = vmatprep.subr.mxu0 0.0
        %1147 = vmatpush2.msra.mxu0 0.0
        %1148 = vmatprep.subr.mxu0 0.0
        %1149 = vmatpush2.msra.mxu0 0.0
        %1150 = vmatprep.subr.mxu0 0.0
        %1151 = vmatpush2.msra.mxu0 0.0
        %1152 = vmatprep.subr.mxu0 0.0
        %1153 = vmatpush2.msra.mxu0 0.0
        %1154 = vmatprep.subr.mxu0 0.0
        %1155 = vmatpush2.msra.mxu0 0.0
        %1156 = vmatprep.subr.mxu0 0.0
        %1157 = vmatpush2.msra.mxu0 0.0
        %1158 = vmatprep.subr.mxu0 0.0
        %1159 = vmatpush2.msra.mxu0 0.0
        %1160 = vmatprep.subr.mxu0 0.0
        %1161 = vmatpush2.msra.mxu0 0.0
        %1162 = vmatprep.subr.mxu0 0.0
        %1163 = vmatpush2.msra.mxu0 0.0
        %1164 = vmatprep.subr.mxu0 0.0
        %1165 = vmatpush2.msra.mxu0 0.0
        %1166 = vmatprep.subr.mxu0 0.0
        %1167 = vmatpush2.msra.mxu0 0.0
        %1168 = vmatprep.subr.mxu0 0.0
        %1169 = vmatpush2.msra.mxu0 0.0
        %1170 = vmatprep.subr.mxu0 0.0
        %1171 = vmatpush2.msra.mxu0 0.0
        %1172 = vmatprep.subr.mxu0 0.0
        %1173 = vmatpush2.msra.mxu0 0.0
        %1174 = vmatprep.mubr.f32.mxu0 0.0
        %1175 = vmatmul.mubr.f32.gmra.mxu0 %v1108
        %v1176 = vpop.f32.mrf.mxu0
        %v1177 = vadd.f32 0.0, %v1176
        %v1178 = vpop.f32.mrf.mxu0
        %1179 = vdwg.mxu0
        %1182 = vrot.lane.b32.xlu0 %v1098, 8
        %v1183 = vpop.permute.xlu0 %1182
        %1184 = vrot.lane.b32.xlu0 %v1177, 8
        %v1185 = vpop.permute.xlu0 %1184
        %v1188 = vadd.f32 %v467, %v1183
        %v1189 = vadd.f32 %v467, %v1185
        %1190 = vrot.lane.b32.xlu0 %v468, 112
        %v1191 = vpop.permute.xlu0 %1190
        %1192 = vrot.lane.b32.xlu0 %v449, 112
        %v1193 = vpop.permute.xlu0 %1192
        %1194 = vrot.lane.b32.xlu0 %v454, 112
        %v1195 = vpop.permute.xlu0 %1194
        %v1196 = vsel %vm469, %v1191, 0
        %v1198 = vsel %vm469, %v1193, 0
        %v1200 = vsel %vm469, %v1195, 0
        %1202 = vmatprep.subr.mxu0 0.0
        %1203 = vmatpush1.xpose.msra.mxu0 0.0
        %1204 = vmatprep.subr.mxu0 0.0
        %1205 = vmatpush1.xpose.msra.mxu0 0.0
        %1206 = vmatprep.subr.mxu0 0.0
        %1207 = vmatpush1.xpose.msra.mxu0 0.0
        %1208 = vmatprep.subr.mxu0 0.0
        %1209 = vmatpush1.xpose.msra.mxu0 0.0
        %1210 = vmatprep.subr.mxu0 0.0
        %1211 = vmatpush1.xpose.msra.mxu0 0.0
        %1212 = vmatprep.subr.mxu0 0.0
        %1213 = vmatpush1.xpose.msra.mxu0 0.0
        %1214 = vmatprep.subr.mxu0 0.0
        %1215 = vmatpush1.xpose.msra.mxu0 0.0
        %1216 = vmatprep.subr.mxu0 0.0
        %1217 = vmatpush1.xpose.msra.mxu0 0.0
        %1218 = vmatprep.subr.mxu0 0.0
        %1219 = vmatpush1.xpose.msra.mxu0 0.0
        %1220 = vmatprep.subr.mxu0 0.0
        %1221 = vmatpush1.xpose.msra.mxu0 0.0
        %1222 = vmatprep.subr.mxu0 0.0
        %1223 = vmatpush1.xpose.msra.mxu0 0.0
        %1224 = vmatprep.subr.mxu0 0.0
        %1225 = vmatpush1.xpose.msra.mxu0 0.0
        %1226 = vmatprep.subr.mxu0 0.0
        %1227 = vmatpush1.xpose.msra.mxu0 0.0
        %1228 = vmatprep.subr.mxu0 0.0
        %1229 = vmatpush1.xpose.msra.mxu0 0.0
        %1230 = vmatprep.subr.mxu0 0.0
        %1231 = vmatpush1.xpose.msra.mxu0 %v1200
        %1232 = vmatprep.subr.mxu0 0.0
        %1233 = vmatpush1.xpose.msra.mxu0 %v1198
        %1234 = vmatprep.subr.mxu0 0.0
        %1235 = vmatpush2.xpose.msra.mxu0 0.0
        %1236 = vmatprep.subr.mxu0 0.0
        %1237 = vmatpush2.xpose.msra.mxu0 0.0
        %1238 = vmatprep.subr.mxu0 0.0
        %1239 = vmatpush2.xpose.msra.mxu0 0.0
        %1240 = vmatprep.subr.mxu0 0.0
        %1241 = vmatpush2.xpose.msra.mxu0 0.0
        %1242 = vmatprep.subr.mxu0 0.0
        %1243 = vmatpush2.xpose.msra.mxu0 0.0
        %1244 = vmatprep.subr.mxu0 0.0
        %1245 = vmatpush2.xpose.msra.mxu0 0.0
        %1246 = vmatprep.subr.mxu0 0.0
        %1247 = vmatpush2.xpose.msra.mxu0 0.0
        %1248 = vmatprep.subr.mxu0 0.0
        %1249 = vmatpush2.xpose.msra.mxu0 0.0
        %1250 = vmatprep.subr.mxu0 0.0
        %1251 = vmatpush2.xpose.msra.mxu0 0.0
        %1252 = vmatprep.subr.mxu0 0.0
        %1253 = vmatpush2.xpose.msra.mxu0 0.0
        %1254 = vmatprep.subr.mxu0 0.0
        %1255 = vmatpush2.xpose.msra.mxu0 0.0
        %1256 = vmatprep.subr.mxu0 0.0
        %1257 = vmatpush2.xpose.msra.mxu0 0.0
        %1258 = vmatprep.subr.mxu0 0.0
        %1259 = vmatpush2.xpose.msra.mxu0 0.0
        %1260 = vmatprep.subr.mxu0 0.0
        %1261 = vmatpush2.xpose.msra.mxu0 0.0
        %1262 = vmatprep.subr.mxu0 0.0
        %1263 = vmatpush2.xpose.msra.mxu0 0.0
        %1264 = vmatprep.subr.mxu0 0.0
        %1265 = vmatpush2.xpose.msra.mxu0 0.0
        %1266 = vmatprep.mubr.f32.mxu0 0.0
        %1267 = vmatmul.mubr.f32.gmra.mxu0 %v1196
        %v1268 = vpop.f32.mrf.mxu0
        %v1269 = vadd.f32 0.0, %v1268
        %v1270 = vpop.f32.mrf.mxu0
        %1271 = vdwg.mxu0
        %1272 = vrot.lane.b32.xlu0 %v459, 112
        %v1273 = vpop.permute.xlu0 %1272
        %1274 = vrot.lane.b32.xlu0 %v464, 112
        %v1275 = vpop.permute.xlu0 %1274
        %v1276 = vsel %vm469, %v1273, 0
        %v1278 = vsel %vm469, %v1275, 0
        %1280 = vmatprep.subr.mxu0 0.0
        %1281 = vmatpush1.xpose.msra.mxu0 0.0
        %1282 = vmatprep.subr.mxu0 0.0
        %1283 = vmatpush1.xpose.msra.mxu0 0.0
        %1284 = vmatprep.subr.mxu0 0.0
        %1285 = vmatpush1.xpose.msra.mxu0 0.0
        %1286 = vmatprep.subr.mxu0 0.0
        %1287 = vmatpush1.xpose.msra.mxu0 0.0
        %1288 = vmatprep.subr.mxu0 0.0
        %1289 = vmatpush1.xpose.msra.mxu0 0.0
        %1290 = vmatprep.subr.mxu0 0.0
        %1291 = vmatpush1.xpose.msra.mxu0 0.0
        %1292 = vmatprep.subr.mxu0 0.0
        %1293 = vmatpush1.xpose.msra.mxu0 0.0
        %1294 = vmatprep.subr.mxu0 0.0
        %1295 = vmatpush1.xpose.msra.mxu0 0.0
        %1296 = vmatprep.subr.mxu0 0.0
        %1297 = vmatpush1.xpose.msra.mxu0 0.0
        %1298 = vmatprep.subr.mxu0 0.0
        %1299 = vmatpush1.xpose.msra.mxu0 0.0
        %1300 = vmatprep.subr.mxu0 0.0
        %1301 = vmatpush1.xpose.msra.mxu0 0.0
        %1302 = vmatprep.subr.mxu0 0.0
        %1303 = vmatpush1.xpose.msra.mxu0 0.0
        %1304 = vmatprep.subr.mxu0 0.0
        %1305 = vmatpush1.xpose.msra.mxu0 0.0
        %1306 = vmatprep.subr.mxu0 0.0
        %1307 = vmatpush1.xpose.msra.mxu0 0.0
        %1308 = vmatprep.subr.mxu0 0.0
        %1309 = vmatpush1.xpose.msra.mxu0 %v1278
        %1310 = vmatprep.subr.mxu0 0.0
        %1311 = vmatpush1.xpose.msra.mxu0 %v1276
        %1312 = vmatprep.subr.mxu0 0.0
        %1313 = vmatpush2.xpose.msra.mxu0 0.0
        %1314 = vmatprep.subr.mxu0 0.0
        %1315 = vmatpush2.xpose.msra.mxu0 0.0
        %1316 = vmatprep.subr.mxu0 0.0
        %1317 = vmatpush2.xpose.msra.mxu0 0.0
        %1318 = vmatprep.subr.mxu0 0.0
        %1319 = vmatpush2.xpose.msra.mxu0 0.0
        %1320 = vmatprep.subr.mxu0 0.0
        %1321 = vmatpush2.xpose.msra.mxu0 0.0
        %1322 = vmatprep.subr.mxu0 0.0
        %1323 = vmatpush2.xpose.msra.mxu0 0.0
        %1324 = vmatprep.subr.mxu0 0.0
        %1325 = vmatpush2.xpose.msra.mxu0 0.0
        %1326 = vmatprep.subr.mxu0 0.0
        %1327 = vmatpush2.xpose.msra.mxu0 0.0
        %1328 = vmatprep.subr.mxu0 0.0
        %1329 = vmatpush2.xpose.msra.mxu0 0.0
        %1330 = vmatprep.subr.mxu0 0.0
        %1331 = vmatpush2.xpose.msra.mxu0 0.0
        %1332 = vmatprep.subr.mxu0 0.0
        %1333 = vmatpush2.xpose.msra.mxu0 0.0
        %1334 = vmatprep.subr.mxu0 0.0
        %1335 = vmatpush2.xpose.msra.mxu0 0.0
        %1336 = vmatprep.subr.mxu0 0.0
        %1337 = vmatpush2.xpose.msra.mxu0 0.0
        %1338 = vmatprep.subr.mxu0 0.0
        %1339 = vmatpush2.xpose.msra.mxu0 0.0
        %1340 = vmatprep.subr.mxu0 0.0
        %1341 = vmatpush2.xpose.msra.mxu0 0.0
        %1342 = vmatprep.subr.mxu0 0.0
        %1343 = vmatpush2.xpose.msra.mxu0 0.0
        %1344 = vmatprep.mubr.f32.mxu0 0.0
        %1345 = vmatmul.mubr.f32.gmra.mxu0 %v1196
        %v1346 = vpop.f32.mrf.mxu0
        %v1347 = vadd.f32 0.0, %v1346
        %v1348 = vpop.f32.mrf.mxu0
        %1349 = vdwg.mxu0
        %v1350 = vsel %vm625, %v1269, -inf
        %v1351 = vrot.slane %v1350, 4
        %v1352 = vmax.f32 %v1350, %v1351
        %v1353 = vrot.slane %v1352, 2
        %v1354 = vmax.f32 %v1352, %v1353
        %v1355 = vrot.slane %v1354, 1
        %v1356 = vmax.f32 %v1354, %v1355
        %v1357 = vsel %vm625, %v1347, -inf
        %v1358 = vrot.slane %v1357, 4
        %v1359 = vmax.f32 %v1357, %v1358
        %v1360 = vrot.slane %v1359, 2
        %v1361 = vmax.f32 %v1359, %v1360
        %v1362 = vrot.slane %v1361, 1
        %v1363 = vmax.f32 %v1361, %v1362
        %v1364 = vsub.f32 %v1269, %v1356
        %v1365 = vsub.f32 %v1347, %v1363
        %v1366 = vmul.f32 %v1364, 1.442695
        %v1367 = vpow.pop %v1366
        %v1368 = vmul.f32 %v1365, 1.442695
        %v1369 = vpow.pop %v1368
        %v1370 = vsel %vm625, %v1367, 0.0
        %v1371 = vrot.slane %v1370, 4
        %v1372 = vadd.f32 %v1370, %v1371
        %v1373 = vrot.slane %v1372, 2
        %v1374 = vadd.f32 %v1372, %v1373
        %v1375 = vrot.slane %v1374, 1
        %v1376 = vadd.f32 %v1374, %v1375
        %v1377 = vsel %vm625, %v1369, 0.0
        %v1378 = vrot.slane %v1377, 4
        %v1379 = vadd.f32 %v1377, %v1378
        %v1380 = vrot.slane %v1379, 2
        %v1381 = vadd.f32 %v1379, %v1380
        %v1382 = vrot.slane %v1381, 1
        %v1383 = vadd.f32 %v1381, %v1382
        %v1384 = vrcp.pop %v1376
        %v1385 = vrcp.pop %v1383
        %v1386 = vmul.f32 %v1367, %v1384
        %v1387 = vmul.f32 %v1369, %v1385
        %1388 = vrot.lane.b32.xlu0 %v449, 80
        %v1389 = vpop.permute.xlu0 %1388
        %1390 = vrot.lane.b32.xlu0 %v454, 80
        %v1391 = vpop.permute.xlu0 %1390
        %v1395 = vsel %vm625, %v1386, 0
        %1397 = vmatprep.subr.mxu0 0.0
        %1398 = vmatpush1.msra.mxu0 0.0
        %1399 = vmatprep.subr.mxu0 0.0
        %1400 = vmatpush1.msra.mxu0 0.0
        %1401 = vmatprep.subr.mxu0 0.0
        %1402 = vmatpush1.msra.mxu0 0.0
        %1403 = vmatprep.subr.mxu0 0.0
        %1404 = vmatpush1.msra.mxu0 0.0
        %1405 = vmatprep.subr.mxu0 0.0
        %1406 = vmatpush1.msra.mxu0 0.0
        %1407 = vmatprep.subr.mxu0 0.0
        %1408 = vmatpush1.msra.mxu0 0.0
        %1409 = vmatprep.subr.mxu0 0.0
        %1410 = vmatpush1.msra.mxu0 0.0
        %1411 = vmatprep.subr.mxu0 0.0
        %1412 = vmatpush1.msra.mxu0 0.0
        %1413 = vmatprep.subr.mxu0 0.0
        %1414 = vmatpush1.msra.mxu0 0.0
        %1415 = vmatprep.subr.mxu0 0.0
        %1416 = vmatpush1.msra.mxu0 0.0
        %1417 = vmatprep.subr.mxu0 0.0
        %1418 = vmatpush1.msra.mxu0 0.0
        %1419 = vmatprep.subr.mxu0 0.0
        %1420 = vmatpush1.msra.mxu0 0.0
        %1421 = vmatprep.subr.mxu0 0.0
        %1422 = vmatpush1.msra.mxu0 0.0
        %1423 = vmatprep.subr.mxu0 0.0
        %1424 = vmatpush1.msra.mxu0 0.0
        %1425 = vmatprep.subr.mxu0 0.0
        %1426 = vmatpush1.msra.mxu0 %v1391
        %1427 = vmatprep.subr.mxu0 0.0
        %1428 = vmatpush1.msra.mxu0 %v1389
        %1429 = vmatprep.subr.mxu0 0.0
        %1430 = vmatpush2.msra.mxu0 0.0
        %1431 = vmatprep.subr.mxu0 0.0
        %1432 = vmatpush2.msra.mxu0 0.0
        %1433 = vmatprep.subr.mxu0 0.0
        %1434 = vmatpush2.msra.mxu0 0.0
        %1435 = vmatprep.subr.mxu0 0.0
        %1436 = vmatpush2.msra.mxu0 0.0
        %1437 = vmatprep.subr.mxu0 0.0
        %1438 = vmatpush2.msra.mxu0 0.0
        %1439 = vmatprep.subr.mxu0 0.0
        %1440 = vmatpush2.msra.mxu0 0.0
        %1441 = vmatprep.subr.mxu0 0.0
        %1442 = vmatpush2.msra.mxu0 0.0
        %1443 = vmatprep.subr.mxu0 0.0
        %1444 = vmatpush2.msra.mxu0 0.0
        %1445 = vmatprep.subr.mxu0 0.0
        %1446 = vmatpush2.msra.mxu0 0.0
        %1447 = vmatprep.subr.mxu0 0.0
        %1448 = vmatpush2.msra.mxu0 0.0
        %1449 = vmatprep.subr.mxu0 0.0
        %1450 = vmatpush2.msra.mxu0 0.0
        %1451 = vmatprep.subr.mxu0 0.0
        %1452 = vmatpush2.msra.mxu0 0.0
        %1453 = vmatprep.subr.mxu0 0.0
        %1454 = vmatpush2.msra.mxu0 0.0
        %1455 = vmatprep.subr.mxu0 0.0
        %1456 = vmatpush2.msra.mxu0 0.0
        %1457 = vmatprep.subr.mxu0 0.0
        %1458 = vmatpush2.msra.mxu0 0.0
        %1459 = vmatprep.subr.mxu0 0.0
        %1460 = vmatpush2.msra.mxu0 0.0
        %1461 = vmatprep.mubr.f32.mxu0 0.0
        %1462 = vmatmul.mubr.f32.gmra.mxu0 %v1395
        %v1463 = vpop.f32.mrf.mxu0
        %v1464 = vadd.f32 0.0, %v1463
        %v1465 = vpop.f32.mrf.mxu0
        %1466 = vdwg.mxu0
        %1467 = vrot.lane.b32.xlu0 %v459, 80
        %v1468 = vpop.permute.xlu0 %1467
        %1469 = vrot.lane.b32.xlu0 %v464, 80
        %v1470 = vpop.permute.xlu0 %1469
        %v1474 = vsel %vm625, %v1387, 0
        %1476 = vmatprep.subr.mxu0 0.0
        %1477 = vmatpush1.msra.mxu0 0.0
        %1478 = vmatprep.subr.mxu0 0.0
        %1479 = vmatpush1.msra.mxu0 0.0
        %1480 = vmatprep.subr.mxu0 0.0
        %1481 = vmatpush1.msra.mxu0 0.0
        %1482 = vmatprep.subr.mxu0 0.0
        %1483 = vmatpush1.msra.mxu0 0.0
        %1484 = vmatprep.subr.mxu0 0.0
        %1485 = vmatpush1.msra.mxu0 0.0
        %1486 = vmatprep.subr.mxu0 0.0
        %1487 = vmatpush1.msra.mxu0 0.0
        %1488 = vmatprep.subr.mxu0 0.0
        %1489 = vmatpush1.msra.mxu0 0.0
        %1490 = vmatprep.subr.mxu0 0.0
        %1491 = vmatpush1.msra.mxu0 0.0
        %1492 = vmatprep.subr.mxu0 0.0
        %1493 = vmatpush1.msra.mxu0 0.0
        %1494 = vmatprep.subr.mxu0 0.0
        %1495 = vmatpush1.msra.mxu0 0.0
        %1496 = vmatprep.subr.mxu0 0.0
        %1497 = vmatpush1.msra.mxu0 0.0
        %1498 = vmatprep.subr.mxu0 0.0
        %1499 = vmatpush1.msra.mxu0 0.0
        %1500 = vmatprep.subr.mxu0 0.0
        %1501 = vmatpush1.msra.mxu0 0.0
        %1502 = vmatprep.subr.mxu0 0.0
        %1503 = vmatpush1.msra.mxu0 0.0
        %1504 = vmatprep.subr.mxu0 0.0
        %1505 = vmatpush1.msra.mxu0 %v1470
        %1506 = vmatprep.subr.mxu0 0.0
        %1507 = vmatpush1.msra.mxu0 %v1468
        %1508 = vmatprep.subr.mxu0 0.0
        %1509 = vmatpush2.msra.mxu0 0.0
        %1510 = vmatprep.subr.mxu0 0.0
        %1511 = vmatpush2.msra.mxu0 0.0
        %1512 = vmatprep.subr.mxu0 0.0
        %1513 = vmatpush2.msra.mxu0 0.0
        %1514 = vmatprep.subr.mxu0 0.0
        %1515 = vmatpush2.msra.mxu0 0.0
        %1516 = vmatprep.subr.mxu0 0.0
        %1517 = vmatpush2.msra.mxu0 0.0
        %1518 = vmatprep.subr.mxu0 0.0
        %1519 = vmatpush2.msra.mxu0 0.0
        %1520 = vmatprep.subr.mxu0 0.0
        %1521 = vmatpush2.msra.mxu0 0.0
        %1522 = vmatprep.subr.mxu0 0.0
        %1523 = vmatpush2.msra.mxu0 0.0
        %1524 = vmatprep.subr.mxu0 0.0
        %1525 = vmatpush2.msra.mxu0 0.0
        %1526 = vmatprep.subr.mxu0 0.0
        %1527 = vmatpush2.msra.mxu0 0.0
        %1528 = vmatprep.subr.mxu0 0.0
        %1529 = vmatpush2.msra.mxu0 0.0
        %1530 = vmatprep.subr.mxu0 0.0
        %1531 = vmatpush2.msra.mxu0 0.0
        %1532 = vmatprep.subr.mxu0 0.0
        %1533 = vmatpush2.msra.mxu0 0.0
        %1534 = vmatprep.subr.mxu0 0.0
        %1535 = vmatpush2.msra.mxu0 0.0
        %1536 = vmatprep.subr.mxu0 0.0
        %1537 = vmatpush2.msra.mxu0 0.0
        %1538 = vmatprep.subr.mxu0 0.0
        %1539 = vmatpush2.msra.mxu0 0.0
        %1540 = vmatprep.mubr.f32.mxu0 0.0
        %1541 = vmatmul.mubr.f32.gmra.mxu0 %v1474
        %v1542 = vpop.f32.mrf.mxu0
        %v1543 = vadd.f32 0.0, %v1542
        %v1544 = vpop.f32.mrf.mxu0
        %1545 = vdwg.mxu0
        %1548 = vrot.lane.b32.xlu0 %v1464, 16
        %v1549 = vpop.permute.xlu0 %1548
        %1550 = vrot.lane.b32.xlu0 %v1543, 16
        %v1551 = vpop.permute.xlu0 %1550
        %v1554 = vadd.f32 %v467, %v1549
        %v1555 = vadd.f32 %v467, %v1551
        %1556 = vrot.lane.b32.xlu0 %v468, 104
        %v1557 = vpop.permute.xlu0 %1556
        %1558 = vrot.lane.b32.xlu0 %v449, 104
        %v1559 = vpop.permute.xlu0 %1558
        %1560 = vrot.lane.b32.xlu0 %v454, 104
        %v1561 = vpop.permute.xlu0 %1560
        %v1562 = vsel %vm469, %v1557, 0
        %v1564 = vsel %vm469, %v1559, 0
        %v1566 = vsel %vm469, %v1561, 0
        %1568 = vmatprep.subr.mxu0 0.0
        %1569 = vmatpush1.xpose.msra.mxu0 0.0
        %1570 = vmatprep.subr.mxu0 0.0
        %1571 = vmatpush1.xpose.msra.mxu0 0.0
        %1572 = vmatprep.subr.mxu0 0.0
        %1573 = vmatpush1.xpose.msra.mxu0 0.0
        %1574 = vmatprep.subr.mxu0 0.0
        %1575 = vmatpush1.xpose.msra.mxu0 0.0
        %1576 = vmatprep.subr.mxu0 0.0
        %1577 = vmatpush1.xpose.msra.mxu0 0.0
        %1578 = vmatprep.subr.mxu0 0.0
        %1579 = vmatpush1.xpose.msra.mxu0 0.0
        %1580 = vmatprep.subr.mxu0 0.0
        %1581 = vmatpush1.xpose.msra.mxu0 0.0
        %1582 = vmatprep.subr.mxu0 0.0
        %1583 = vmatpush1.xpose.msra.mxu0 0.0
        %1584 = vmatprep.subr.mxu0 0.0
        %1585 = vmatpush1.xpose.msra.mxu0 0.0
        %1586 = vmatprep.subr.mxu0 0.0
        %1587 = vmatpush1.xpose.msra.mxu0 0.0
        %1588 = vmatprep.subr.mxu0 0.0
        %1589 = vmatpush1.xpose.msra.mxu0 0.0
        %1590 = vmatprep.subr.mxu0 0.0
        %1591 = vmatpush1.xpose.msra.mxu0 0.0
        %1592 = vmatprep.subr.mxu0 0.0
        %1593 = vmatpush1.xpose.msra.mxu0 0.0
        %1594 = vmatprep.subr.mxu0 0.0
        %1595 = vmatpush1.xpose.msra.mxu0 0.0
        %1596 = vmatprep.subr.mxu0 0.0
        %1597 = vmatpush1.xpose.msra.mxu0 %v1566
        %1598 = vmatprep.subr.mxu0 0.0
        %1599 = vmatpush1.xpose.msra.mxu0 %v1564
        %1600 = vmatprep.subr.mxu0 0.0
        %1601 = vmatpush2.xpose.msra.mxu0 0.0
        %1602 = vmatprep.subr.mxu0 0.0
        %1603 = vmatpush2.xpose.msra.mxu0 0.0
        %1604 = vmatprep.subr.mxu0 0.0
        %1605 = vmatpush2.xpose.msra.mxu0 0.0
        %1606 = vmatprep.subr.mxu0 0.0
        %1607 = vmatpush2.xpose.msra.mxu0 0.0
        %1608 = vmatprep.subr.mxu0 0.0
        %1609 = vmatpush2.xpose.msra.mxu0 0.0
        %1610 = vmatprep.subr.mxu0 0.0
        %1611 = vmatpush2.xpose.msra.mxu0 0.0
        %1612 = vmatprep.subr.mxu0 0.0
        %1613 = vmatpush2.xpose.msra.mxu0 0.0
        %1614 = vmatprep.subr.mxu0 0.0
        %1615 = vmatpush2.xpose.msra.mxu0 0.0
        %1616 = vmatprep.subr.mxu0 0.0
        %1617 = vmatpush2.xpose.msra.mxu0 0.0
        %1618 = vmatprep.subr.mxu0 0.0
        %1619 = vmatpush2.xpose.msra.mxu0 0.0
        %1620 = vmatprep.subr.mxu0 0.0
        %1621 = vmatpush2.xpose.msra.mxu0 0.0
        %1622 = vmatprep.subr.mxu0 0.0
        %1623 = vmatpush2.xpose.msra.mxu0 0.0
        %1624 = vmatprep.subr.mxu0 0.0
        %1625 = vmatpush2.xpose.msra.mxu0 0.0
        %1626 = vmatprep.subr.mxu0 0.0
        %1627 = vmatpush2.xpose.msra.mxu0 0.0
        %1628 = vmatprep.subr.mxu0 0.0
        %1629 = vmatpush2.xpose.msra.mxu0 0.0
        %1630 = vmatprep.subr.mxu0 0.0
        %1631 = vmatpush2.xpose.msra.mxu0 0.0
        %1632 = vmatprep.mubr.f32.mxu0 0.0
        %1633 = vmatmul.mubr.f32.gmra.mxu0 %v1562
        %v1634 = vpop.f32.mrf.mxu0
        %v1635 = vadd.f32 0.0, %v1634
        %v1636 = vpop.f32.mrf.mxu0
        %1637 = vdwg.mxu0
        %1638 = vrot.lane.b32.xlu0 %v459, 104
        %v1639 = vpop.permute.xlu0 %1638
        %1640 = vrot.lane.b32.xlu0 %v464, 104
        %v1641 = vpop.permute.xlu0 %1640
        %v1642 = vsel %vm469, %v1639, 0
        %v1644 = vsel %vm469, %v1641, 0
        %1646 = vmatprep.subr.mxu0 0.0
        %1647 = vmatpush1.xpose.msra.mxu0 0.0
        %1648 = vmatprep.subr.mxu0 0.0
        %1649 = vmatpush1.xpose.msra.mxu0 0.0
        %1650 = vmatprep.subr.mxu0 0.0
        %1651 = vmatpush1.xpose.msra.mxu0 0.0
        %1652 = vmatprep.subr.mxu0 0.0
        %1653 = vmatpush1.xpose.msra.mxu0 0.0
        %1654 = vmatprep.subr.mxu0 0.0
        %1655 = vmatpush1.xpose.msra.mxu0 0.0
        %1656 = vmatprep.subr.mxu0 0.0
        %1657 = vmatpush1.xpose.msra.mxu0 0.0
        %1658 = vmatprep.subr.mxu0 0.0
        %1659 = vmatpush1.xpose.msra.mxu0 0.0
        %1660 = vmatprep.subr.mxu0 0.0
        %1661 = vmatpush1.xpose.msra.mxu0 0.0
        %1662 = vmatprep.subr.mxu0 0.0
        %1663 = vmatpush1.xpose.msra.mxu0 0.0
        %1664 = vmatprep.subr.mxu0 0.0
        %1665 = vmatpush1.xpose.msra.mxu0 0.0
        %1666 = vmatprep.subr.mxu0 0.0
        %1667 = vmatpush1.xpose.msra.mxu0 0.0
        %1668 = vmatprep.subr.mxu0 0.0
        %1669 = vmatpush1.xpose.msra.mxu0 0.0
        %1670 = vmatprep.subr.mxu0 0.0
        %1671 = vmatpush1.xpose.msra.mxu0 0.0
        %1672 = vmatprep.subr.mxu0 0.0
        %1673 = vmatpush1.xpose.msra.mxu0 0.0
        %1674 = vmatprep.subr.mxu0 0.0
        %1675 = vmatpush1.xpose.msra.mxu0 %v1644
        %1676 = vmatprep.subr.mxu0 0.0
        %1677 = vmatpush1.xpose.msra.mxu0 %v1642
        %1678 = vmatprep.subr.mxu0 0.0
        %1679 = vmatpush2.xpose.msra.mxu0 0.0
        %1680 = vmatprep.subr.mxu0 0.0
        %1681 = vmatpush2.xpose.msra.mxu0 0.0
        %1682 = vmatprep.subr.mxu0 0.0
        %1683 = vmatpush2.xpose.msra.mxu0 0.0
        %1684 = vmatprep.subr.mxu0 0.0
        %1685 = vmatpush2.xpose.msra.mxu0 0.0
        %1686 = vmatprep.subr.mxu0 0.0
        %1687 = vmatpush2.xpose.msra.mxu0 0.0
        %1688 = vmatprep.subr.mxu0 0.0
        %1689 = vmatpush2.xpose.msra.mxu0 0.0
        %1690 = vmatprep.subr.mxu0 0.0
        %1691 = vmatpush2.xpose.msra.mxu0 0.0
        %1692 = vmatprep.subr.mxu0 0.0
        %1693 = vmatpush2.xpose.msra.mxu0 0.0
        %1694 = vmatprep.subr.mxu0 0.0
        %1695 = vmatpush2.xpose.msra.mxu0 0.0
        %1696 = vmatprep.subr.mxu0 0.0
        %1697 = vmatpush2.xpose.msra.mxu0 0.0
        %1698 = vmatprep.subr.mxu0 0.0
        %1699 = vmatpush2.xpose.msra.mxu0 0.0
        %1700 = vmatprep.subr.mxu0 0.0
        %1701 = vmatpush2.xpose.msra.mxu0 0.0
        %1702 = vmatprep.subr.mxu0 0.0
        %1703 = vmatpush2.xpose.msra.mxu0 0.0
        %1704 = vmatprep.subr.mxu0 0.0
        %1705 = vmatpush2.xpose.msra.mxu0 0.0
        %1706 = vmatprep.subr.mxu0 0.0
        %1707 = vmatpush2.xpose.msra.mxu0 0.0
        %1708 = vmatprep.subr.mxu0 0.0
        %1709 = vmatpush2.xpose.msra.mxu0 0.0
        %1710 = vmatprep.mubr.f32.mxu0 0.0
        %1711 = vmatmul.mubr.f32.gmra.mxu0 %v1562
        %v1712 = vpop.f32.mrf.mxu0
        %v1713 = vadd.f32 0.0, %v1712
        %v1714 = vpop.f32.mrf.mxu0
        %1715 = vdwg.mxu0
        %v1716 = vsel %vm625, %v1635, -inf
        %v1717 = vrot.slane %v1716, 4
        %v1718 = vmax.f32 %v1716, %v1717
        %v1719 = vrot.slane %v1718, 2
        %v1720 = vmax.f32 %v1718, %v1719
        %v1721 = vrot.slane %v1720, 1
        %v1722 = vmax.f32 %v1720, %v1721
        %v1723 = vsel %vm625, %v1713, -inf
        %v1724 = vrot.slane %v1723, 4
        %v1725 = vmax.f32 %v1723, %v1724
        %v1726 = vrot.slane %v1725, 2
        %v1727 = vmax.f32 %v1725, %v1726
        %v1728 = vrot.slane %v1727, 1
        %v1729 = vmax.f32 %v1727, %v1728
        %v1730 = vsub.f32 %v1635, %v1722
        %v1731 = vsub.f32 %v1713, %v1729
        %v1732 = vmul.f32 %v1730, 1.442695
        %v1733 = vpow.pop %v1732
        %v1734 = vmul.f32 %v1731, 1.442695
        %v1735 = vpow.pop %v1734
        %v1736 = vsel %vm625, %v1733, 0.0
        %v1737 = vrot.slane %v1736, 4
        %v1738 = vadd.f32 %v1736, %v1737
        %v1739 = vrot.slane %v1738, 2
        %v1740 = vadd.f32 %v1738, %v1739
        %v1741 = vrot.slane %v1740, 1
        %v1742 = vadd.f32 %v1740, %v1741
        %v1743 = vsel %vm625, %v1735, 0.0
        %v1744 = vrot.slane %v1743, 4
        %v1745 = vadd.f32 %v1743, %v1744
        %v1746 = vrot.slane %v1745, 2
        %v1747 = vadd.f32 %v1745, %v1746
        %v1748 = vrot.slane %v1747, 1
        %v1749 = vadd.f32 %v1747, %v1748
        %v1750 = vrcp.pop %v1742
        %v1751 = vrcp.pop %v1749
        %v1752 = vmul.f32 %v1733, %v1750
        %v1753 = vmul.f32 %v1735, %v1751
        %1754 = vrot.lane.b32.xlu0 %v449, 72
        %v1755 = vpop.permute.xlu0 %1754
        %1756 = vrot.lane.b32.xlu0 %v454, 72
        %v1757 = vpop.permute.xlu0 %1756
        %v1761 = vsel %vm625, %v1752, 0
        %1763 = vmatprep.subr.mxu0 0.0
        %1764 = vmatpush1.msra.mxu0 0.0
        %1765 = vmatprep.subr.mxu0 0.0
        %1766 = vmatpush1.msra.mxu0 0.0
        %1767 = vmatprep.subr.mxu0 0.0
        %1768 = vmatpush1.msra.mxu0 0.0
        %1769 = vmatprep.subr.mxu0 0.0
        %1770 = vmatpush1.msra.mxu0 0.0
        %1771 = vmatprep.subr.mxu0 0.0
        %1772 = vmatpush1.msra.mxu0 0.0
        %1773 = vmatprep.subr.mxu0 0.0
        %1774 = vmatpush1.msra.mxu0 0.0
        %1775 = vmatprep.subr.mxu0 0.0
        %1776 = vmatpush1.msra.mxu0 0.0
        %1777 = vmatprep.subr.mxu0 0.0
        %1778 = vmatpush1.msra.mxu0 0.0
        %1779 = vmatprep.subr.mxu0 0.0
        %1780 = vmatpush1.msra.mxu0 0.0
        %1781 = vmatprep.subr.mxu0 0.0
        %1782 = vmatpush1.msra.mxu0 0.0
        %1783 = vmatprep.subr.mxu0 0.0
        %1784 = vmatpush1.msra.mxu0 0.0
        %1785 = vmatprep.subr.mxu0 0.0
        %1786 = vmatpush1.msra.mxu0 0.0
        %1787 = vmatprep.subr.mxu0 0.0
        %1788 = vmatpush1.msra.mxu0 0.0
        %1789 = vmatprep.subr.mxu0 0.0
        %1790 = vmatpush1.msra.mxu0 0.0
        %1791 = vmatprep.subr.mxu0 0.0
        %1792 = vmatpush1.msra.mxu0 %v1757
        %1793 = vmatprep.subr.mxu0 0.0
        %1794 = vmatpush1.msra.mxu0 %v1755
        %1795 = vmatprep.subr.mxu0 0.0
        %1796 = vmatpush2.msra.mxu0 0.0
        %1797 = vmatprep.subr.mxu0 0.0
        %1798 = vmatpush2.msra.mxu0 0.0
        %1799 = vmatprep.subr.mxu0 0.0
        %1800 = vmatpush2.msra.mxu0 0.0
        %1801 = vmatprep.subr.mxu0 0.0
        %1802 = vmatpush2.msra.mxu0 0.0
        %1803 = vmatprep.subr.mxu0 0.0
        %1804 = vmatpush2.msra.mxu0 0.0
        %1805 = vmatprep.subr.mxu0 0.0
        %1806 = vmatpush2.msra.mxu0 0.0
        %1807 = vmatprep.subr.mxu0 0.0
        %1808 = vmatpush2.msra.mxu0 0.0
        %1809 = vmatprep.subr.mxu0 0.0
        %1810 = vmatpush2.msra.mxu0 0.0
        %1811 = vmatprep.subr.mxu0 0.0
        %1812 = vmatpush2.msra.mxu0 0.0
        %1813 = vmatprep.subr.mxu0 0.0
        %1814 = vmatpush2.msra.mxu0 0.0
        %1815 = vmatprep.subr.mxu0 0.0
        %1816 = vmatpush2.msra.mxu0 0.0
        %1817 = vmatprep.subr.mxu0 0.0
        %1818 = vmatpush2.msra.mxu0 0.0
        %1819 = vmatprep.subr.mxu0 0.0
        %1820 = vmatpush2.msra.mxu0 0.0
        %1821 = vmatprep.subr.mxu0 0.0
        %1822 = vmatpush2.msra.mxu0 0.0
        %1823 = vmatprep.subr.mxu0 0.0
        %1824 = vmatpush2.msra.mxu0 0.0
        %1825 = vmatprep.subr.mxu0 0.0
        %1826 = vmatpush2.msra.mxu0 0.0
        %1827 = vmatprep.mubr.f32.mxu0 0.0
        %1828 = vmatmul.mubr.f32.gmra.mxu0 %v1761
        %v1829 = vpop.f32.mrf.mxu0
        %v1830 = vadd.f32 0.0, %v1829
        %v1831 = vpop.f32.mrf.mxu0
        %1832 = vdwg.mxu0
        %1833 = vrot.lane.b32.xlu0 %v459, 72
        %v1834 = vpop.permute.xlu0 %1833
        %1835 = vrot.lane.b32.xlu0 %v464, 72
        %v1836 = vpop.permute.xlu0 %1835
        %v1840 = vsel %vm625, %v1753, 0
        %1842 = vmatprep.subr.mxu0 0.0
        %1843 = vmatpush1.msra.mxu0 0.0
        %1844 = vmatprep.subr.mxu0 0.0
        %1845 = vmatpush1.msra.mxu0 0.0
        %1846 = vmatprep.subr.mxu0 0.0
        %1847 = vmatpush1.msra.mxu0 0.0
        %1848 = vmatprep.subr.mxu0 0.0
        %1849 = vmatpush1.msra.mxu0 0.0
        %1850 = vmatprep.subr.mxu0 0.0
        %1851 = vmatpush1.msra.mxu0 0.0
        %1852 = vmatprep.subr.mxu0 0.0
        %1853 = vmatpush1.msra.mxu0 0.0
        %1854 = vmatprep.subr.mxu0 0.0
        %1855 = vmatpush1.msra.mxu0 0.0
        %1856 = vmatprep.subr.mxu0 0.0
        %1857 = vmatpush1.msra.mxu0 0.0
        %1858 = vmatprep.subr.mxu0 0.0
        %1859 = vmatpush1.msra.mxu0 0.0
        %1860 = vmatprep.subr.mxu0 0.0
        %1861 = vmatpush1.msra.mxu0 0.0
        %1862 = vmatprep.subr.mxu0 0.0
        %1863 = vmatpush1.msra.mxu0 0.0
        %1864 = vmatprep.subr.mxu0 0.0
        %1865 = vmatpush1.msra.mxu0 0.0
        %1866 = vmatprep.subr.mxu0 0.0
        %1867 = vmatpush1.msra.mxu0 0.0
        %1868 = vmatprep.subr.mxu0 0.0
        %1869 = vmatpush1.msra.mxu0 0.0
        %1870 = vmatprep.subr.mxu0 0.0
        %1871 = vmatpush1.msra.mxu0 %v1836
        %1872 = vmatprep.subr.mxu0 0.0
        %1873 = vmatpush1.msra.mxu0 %v1834
        %1874 = vmatprep.subr.mxu0 0.0
        %1875 = vmatpush2.msra.mxu0 0.0
        %1876 = vmatprep.subr.mxu0 0.0
        %1877 = vmatpush2.msra.mxu0 0.0
        %1878 = vmatprep.subr.mxu0 0.0
        %1879 = vmatpush2.msra.mxu0 0.0
        %1880 = vmatprep.subr.mxu0 0.0
        %1881 = vmatpush2.msra.mxu0 0.0
        %1882 = vmatprep.subr.mxu0 0.0
        %1883 = vmatpush2.msra.mxu0 0.0
        %1884 = vmatprep.subr.mxu0 0.0
        %1885 = vmatpush2.msra.mxu0 0.0
        %1886 = vmatprep.subr.mxu0 0.0
        %1887 = vmatpush2.msra.mxu0 0.0
        %1888 = vmatprep.subr.mxu0 0.0
        %1889 = vmatpush2.msra.mxu0 0.0
        %1890 = vmatprep.subr.mxu0 0.0
        %1891 = vmatpush2.msra.mxu0 0.0
        %1892 = vmatprep.subr.mxu0 0.0
        %1893 = vmatpush2.msra.mxu0 0.0
        %1894 = vmatprep.subr.mxu0 0.0
        %1895 = vmatpush2.msra.mxu0 0.0
        %1896 = vmatprep.subr.mxu0 0.0
        %1897 = vmatpush2.msra.mxu0 0.0
        %1898 = vmatprep.subr.mxu0 0.0
        %1899 = vmatpush2.msra.mxu0 0.0
        %1900 = vmatprep.subr.mxu0 0.0
        %1901 = vmatpush2.msra.mxu0 0.0
        %1902 = vmatprep.subr.mxu0 0.0
        %1903 = vmatpush2.msra.mxu0 0.0
        %1904 = vmatprep.subr.mxu0 0.0
        %1905 = vmatpush2.msra.mxu0 0.0
        %1906 = vmatprep.mubr.f32.mxu0 0.0
        %1907 = vmatmul.mubr.f32.gmra.mxu0 %v1840
        %v1908 = vpop.f32.mrf.mxu0
        %v1909 = vadd.f32 0.0, %v1908
        %v1910 = vpop.f32.mrf.mxu0
        %1911 = vdwg.mxu0
        %1914 = vrot.lane.b32.xlu0 %v1830, 24
        %v1915 = vpop.permute.xlu0 %1914
        %1916 = vrot.lane.b32.xlu0 %v1909, 24
        %v1917 = vpop.permute.xlu0 %1916
        %v1920 = vadd.f32 %v467, %v1915
        %v1921 = vadd.f32 %v467, %v1917
        %v1922 = vsel %vm469, %v822, %v1188
        %v1923 = vsel %vm469, %v823, %v1189
        %v1924 = vsel %vm625, %v1922, %v1554
        %v1925 = vsel %vm625, %v1923, %v1555
        %vm1926 = vcmask 195584
        %v1927 = vsel %vm1926, %v1924, %v1920
        %v1928 = vsel %vm1926, %v1925, %v1921
        %v1929 = vld [vmem:[#allocation8] sm:$0xff]
        %v1930 = vld [vmem:[#allocation8 + $0x8] sm:$0xff]
        %v1931 = vld [vmem:[#allocation8 + $0x10] sm:$0xff]
        %v1932 = vld [vmem:[#allocation8 + $0x18] sm:$0xff]
        %v1933 = vld [vmem:[%s6] sm:$0x1]
        %v1935 = vlaneseq
        %v1936 = vshrl.u32 %v1935, 7
        %v1937 = vsub.s32 0, %v1936
        %v1938 = vrot.slane %v1933, %v1937
        %v1941 = vsel %vm369, %v1927, 0
        %v1944 = vsel %vm369, %v1928, 0
        %1946 = vmatprep.subr.mxu0 0.0
        %1947 = vmatpush1.msra.mxu0 0.0
        %1948 = vmatprep.subr.mxu0 0.0
        %1949 = vmatpush1.msra.mxu0 0.0
        %1950 = vmatprep.subr.mxu0 0.0
        %1951 = vmatpush1.msra.mxu0 0.0
        %1952 = vmatprep.subr.mxu0 0.0
        %1953 = vmatpush1.msra.mxu0 0.0
        %1954 = vmatprep.subr.mxu0 0.0
        %1955 = vmatpush1.msra.mxu0 0.0
        %1956 = vmatprep.subr.mxu0 0.0
        %1957 = vmatpush1.msra.mxu0 0.0
        %1958 = vmatprep.subr.mxu0 0.0
        %1959 = vmatpush1.msra.mxu0 0.0
        %1960 = vmatprep.subr.mxu0 0.0
        %1961 = vmatpush1.msra.mxu0 0.0
        %1962 = vmatprep.subr.mxu0 0.0
        %1963 = vmatpush1.msra.mxu0 0.0
        %1964 = vmatprep.subr.mxu0 0.0
        %1965 = vmatpush1.msra.mxu0 0.0
        %1966 = vmatprep.subr.mxu0 0.0
        %1967 = vmatpush1.msra.mxu0 0.0
        %1968 = vmatprep.subr.mxu0 0.0
        %1969 = vmatpush1.msra.mxu0 0.0
        %1970 = vmatprep.subr.mxu0 0.0
        %1971 = vmatpush1.msra.mxu0 %v1932
        %1972 = vmatprep.subr.mxu0 0.0
        %1973 = vmatpush1.msra.mxu0 %v1931
        %1974 = vmatprep.subr.mxu0 0.0
        %1975 = vmatpush1.msra.mxu0 %v1930
        %1976 = vmatprep.subr.mxu0 0.0
        %1977 = vmatpush1.msra.mxu0 %v1929
        %1978 = vmatprep.subr.mxu0 0.0
        %1979 = vmatpush2.msra.mxu0 0.0
        %1980 = vmatprep.subr.mxu0 0.0
        %1981 = vmatpush2.msra.mxu0 0.0
        %1982 = vmatprep.subr.mxu0 0.0
        %1983 = vmatpush2.msra.mxu0 0.0
        %1984 = vmatprep.subr.mxu0 0.0
        %1985 = vmatpush2.msra.mxu0 0.0
        %1986 = vmatprep.subr.mxu0 0.0
        %1987 = vmatpush2.msra.mxu0 0.0
        %1988 = vmatprep.subr.mxu0 0.0
        %1989 = vmatpush2.msra.mxu0 0.0
        %1990 = vmatprep.subr.mxu0 0.0
        %1991 = vmatpush2.msra.mxu0 0.0
        %1992 = vmatprep.subr.mxu0 0.0
        %1993 = vmatpush2.msra.mxu0 0.0
        %1994 = vmatprep.subr.mxu0 0.0
        %1995 = vmatpush2.msra.mxu0 0.0
        %1996 = vmatprep.subr.mxu0 0.0
        %1997 = vmatpush2.msra.mxu0 0.0
        %1998 = vmatprep.subr.mxu0 0.0
        %1999 = vmatpush2.msra.mxu0 0.0
        %2000 = vmatprep.subr.mxu0 0.0
        %2001 = vmatpush2.msra.mxu0 0.0
        %2002 = vmatprep.subr.mxu0 0.0
        %2003 = vmatpush2.msra.mxu0 0.0
        %2004 = vmatprep.subr.mxu0 0.0
        %2005 = vmatpush2.msra.mxu0 0.0
        %2006 = vmatprep.subr.mxu0 0.0
        %2007 = vmatpush2.msra.mxu0 0.0
        %2008 = vmatprep.subr.mxu0 0.0
        %2009 = vmatpush2.msra.mxu0 0.0
        %2010 = vmatprep.mubr.f32.mxu0 0.0
        %2011 = vmatmul.mubr.f32.gmra.mxu0 %v1941
        %v2012 = vpop.f32.mrf.mxu0
        %v2013 = vadd.f32 %v1938, %v2012
        %v2014 = vpop.f32.mrf.mxu0
        %2015 = vmatprep.mubr.f32.mxu0 0.0
        %2016 = vmatmul.mubr.f32.gmra.mxu0 %v1944
        %v2017 = vpop.f32.mrf.mxu0
        %v2018 = vadd.f32 %v1938, %v2017
        %v2019 = vpop.f32.mrf.mxu0
        %2020 = vdwg.mxu0
        %v2021 = vmax.f32 %v2013, 0.0
        %v2022 = vmax.f32 %v2018, 0.0
        %v2023 = vadd.f32 %v1927, %v2021
        %v2024 = vadd.f32 %v1928, %v2022
        %2025 = vst.msk [vmem:[%s352] sm:$0xff] %vm369, %v2023
        %2026 = vst.msk [vmem:[%s352 + $0x8] sm:$0xff] %vm369, %v2024
        %s2027 = smul.u32 2, %s21
        %p2028 = scmp.lt.s32.totalorder %s2027, 7
        %s2029 = scalar_select %p2028, %s2027, 7
        %s2030 = smul.addr %s2029, 8
        %s2031 = scalar_lea.vmem %s7, %s2030
        // Predicated region
        $region69: #{tpu_custom_call.1} parent=47 // pred_check
          %p2032 = pneg %p191
        $region70: #{tpu_custom_call.1} parent=47 // pred_check_branch
          %2034 = sbr.rel (%p2032) target = $region72
        $region71: #{tpu_custom_call.1} parent=47 // pred_region
          %s2035 = smul.u32 2, %s21
        $region72: #{tpu_custom_call.1} parent=47 // pred_fallthru
          _
      $region48: #{tpu_custom_call.1} parent=5 // pred_fallthru
        _
      %p2036 = scmp.le.s32.totalorder 2, %s16
      // Predicated region
      $region73: #{tpu_custom_call.1} parent=5 // pred_check
        %p2037 = pneg %p2036
      $region74: #{tpu_custom_call.1} parent=5 // pred_check_branch
        %2039 = sbr.rel (%p2037) target = $region76
      $region75: #{tpu_custom_call.1} parent=5 // pred_region
        %s2040 = ssub.s32 %s16, 2
        // Predicated region
        $region77: #{tpu_custom_call.1} parent=75 // pred_check
          %p2041 = pneg %p197
        $region78: #{tpu_custom_call.1} parent=75 // pred_check_branch
          %2043 = sbr.rel (%p2041) target = $region80
        $region79: #{tpu_custom_call.1} parent=75 // pred_region
          %s2044 = smul.u32 2, %s22
          %p2045 = scmp.lt.s32.totalorder %s2044, 7
          %s2046 = scalar_select %p2045, %s2044, 7
          %s2047 = smul.addr %s2046, 8
          %s2048 = scalar_lea.vmem %s7, %s2047
        $region80: #{tpu_custom_call.1} parent=75 // pred_fallthru
          _
      $region76: #{tpu_custom_call.1} parent=5 // pred_fallthru
        _
    $region6: #{tpu_custom_call.1} parent=1 // loop_footer
      %s20 = sadd.s32 1, %s16
    $region7: #{tpu_custom_call.1} parent=1 // loop_footer_branch
      %15 = sbr.rel target = $region3
    $region8: #{tpu_custom_call.1} parent=1 // loop_exit
      _
    %2049 = vsyncpa [#allocation3], 1
    %s2050 = scalar_lea.sflag [#allocation3], 1
    %2051 = vsyncpa %s2050, 1
    %2052 = vsyncpa [#allocation5], 1
    %2053 = vsyncpa [#allocation9], 1

</llo_original>
